<compile_context>
chip_gen: v5e
topology: v5e:2x2
jax: 0.10.0
libtpu: 0.0.40
codegen_flags: <defaults>
</compile_context>

<pallas_src>
import functools

import numpy as np
import jax
import jax.numpy as jnp
from jax import lax
from jax.experimental import pallas as pl
from jax.experimental.pallas import tpu as pltpu


def _round_up(x, m):
    return (x + m - 1) // m * m


def _pick_row_tile(h):
    """Largest row tile in {64,32,16,8} that divides H (strictly smaller than H),
    else fall back to the whole image."""
    for th in (64, 32, 16, 8):
        if th < h and h % th == 0:
            return th
    return h


# ----------------------------------------------------------------------------
# Single fused kernel:
#   3x3 conv (one K=27 MXU dot) + bias + ReLU  ->  bf16 NHWC features
#   + global-average-pool accumulator (across row tiles)
#   + fused linear heads (person-H | horizon | pitch | roll | vfov | camH)
#   + softmax over the person-H logits          (epilogue at the last row step)
# ----------------------------------------------------------------------------
def _backbone_heads_kernel(x_ref, w_ref, b_ref, hw_ref, hb_ref,
                           feat_ref, pool_ref, logits_ref, soft_ref,
                           *, H, W, TH, num_h):
    # x_ref:      (H+2, W+2, Cin)  bf16  padded NHWC image (resident across row steps)
    # w_ref:      (9*Cin, Cp)      bf16  flattened 3x3 conv weights (tap-major K fold)
    # b_ref:      (1, Cp)          f32
    # hw_ref:     (Cp, TOTp)       bf16  fused head weights, lane-padded to 384
    # hb_ref:     (1, TOTp)        f32
    # feat_ref:   (TH, W, Cp)      bf16  conv+ReLU features for this row tile
    # pool_ref:   (1, Cp)          f32   running spatial sum -> mean (accumulator)
    # logits_ref: (1, TOTp)        f32   fused head logits (written at last row step)
    # soft_ref:   (1, num_h)       f32   softmax of the person-H logits
    r = pl.program_id(1)
    n_rows = pl.num_programs(1)
    cin = x_ref.shape[-1]
    cp = feat_ref.shape[-1]

    # ---- im2col inside VMEM: 9 shifted slices lane-concatenated -> ONE dot, K = 9*Cin ----
    row0 = pl.multiple_of(r * TH, TH)
    x = x_ref[pl.ds(row0, TH + 2), :, :]                       # (TH+2, W+2, Cin) bf16
    taps = []
    for dh in range(3):
        for dw in range(3):
            taps.append(x[dh:dh + TH, dw:dw + W, :].reshape(TH * W, cin))
    patches = jnp.concatenate(taps, axis=-1)                   # (TH*W, 9*Cin) bf16
    y = jnp.dot(patches, w_ref[...], preferred_element_type=jnp.float32)
    y = jnp.maximum(y + b_ref[...], 0.0)                       # (TH*W, Cp) f32

    feat_ref[...] = y.reshape(TH, W, cp).astype(feat_ref.dtype)

    # ---- fused global-average-pool: accumulate into the resident output block ----
    @pl.when(r == 0)
    def _():
        pool_ref[...] = jnp.zeros_like(pool_ref)

    pool_ref[...] += jnp.sum(y, axis=0, keepdims=True)

    # ---- epilogue at the last row step: pooled mean + fused heads + softmax ----
    @pl.when(r == n_rows - 1)
    def _():
        pooled = pool_ref[...] * (1.0 / float(H * W))          # (1, Cp) f32
        pool_ref[...] = pooled
        logits = jnp.dot(pooled.astype(hw_ref.dtype), hw_ref[...],
                         preferred_element_type=jnp.float32) + hb_ref[...]
        logits_ref[...] = logits                               # (1, TOTp) lane-dense
        h = logits[:, :num_h]
        m = jnp.max(h, axis=-1, keepdims=True)
        e = jnp.exp(h - m)
        soft_ref[...] = e / jnp.sum(e, axis=-1, keepdims=True)  # exact divide (torch parity)


def fused_backbone_heads(images_nchw, w_flat, bias, head_w, head_b, num_h):
    """images: (B, Cin, H, W) f32.  Returns
       (features bf16 NHWC (B,H,W,Cp), pooled (B,Cp) f32,
        fused logits (B,TOTp) f32, person-H softmax (B,num_h) f32)."""
    B, Cin, H, W = images_nchw.shape
    KK, Cp = w_flat.shape
    TOTp = head_w.shape[1]
    TH = _pick_row_tile(H)
    n_rows = H // TH

    # NHWC, spatial zero-pad, bf16 (halves input DMA bytes for the MXU)
    xp = jnp.pad(jnp.transpose(images_nchw, (0, 2, 3, 1)),
                 ((0, 0), (1, 1), (1, 1), (0, 0))).astype(jnp.bfloat16)

    kern = functools.partial(_backbone_heads_kernel, H=H, W=W, TH=TH, num_h=num_h)
    feat, pooled, logits, soft = pl.pallas_call(
        kern,
        out_shape=(jax.ShapeDtypeStruct((B, H, W, Cp), jnp.bfloat16),
                   jax.ShapeDtypeStruct((B, 1, Cp), jnp.float32),
                   jax.ShapeDtypeStruct((B, 1, TOTp), jnp.float32),
                   jax.ShapeDtypeStruct((B, 1, num_h), jnp.float32)),
        grid=(B, n_rows),
        in_specs=[
            # whole padded image stays resident across the row axis (DMA'd once per image)
            pl.BlockSpec((None, H + 2, W + 2, Cin), lambda b, r: (b, 0, 0, 0)),
            pl.BlockSpec((KK, Cp), lambda b, r: (0, 0)),
            pl.BlockSpec((1, Cp), lambda b, r: (0, 0)),
            pl.BlockSpec((Cp, TOTp), lambda b, r: (0, 0)),
            pl.BlockSpec((1, TOTp), lambda b, r: (0, 0)),
        ],
        out_specs=(
            pl.BlockSpec((None, TH, W, Cp), lambda b, r: (b, r, 0, 0)),
            pl.BlockSpec((None, 1, Cp), lambda b, r: (b, 0, 0)),      # GAP accumulator
            pl.BlockSpec((None, 1, TOTp), lambda b, r: (b, 0, 0)),    # heads (last step)
            pl.BlockSpec((None, 1, num_h), lambda b, r: (b, 0, 0)),   # softmax (last step)
        ),
        compiler_params=pltpu.CompilerParams(
            dimension_semantics=("parallel", "arbitrary")),           # batch across cores
    )(xp, w_flat, bias, head_w, head_b)
    return feat, pooled[:, 0, :], logits[:, 0, :], soft[:, 0, :]


# ----------------------------------------------------------------------------
# Synthetic GeneralizedRCNN forward
# ----------------------------------------------------------------------------
class GeneralizedRCNNPallas:
    """Synthetic Pallas re-implementation of the forward-pass compute."""

    def __init__(self, *, in_channels=3, backbone_channels=32,
                 num_h_classes=16, num_bin_classes=64, seed=0):
        self.in_channels = in_channels
        self.backbone_channels = backbone_channels
        self.num_h_classes = num_h_classes
        self.num_bin_classes = num_bin_classes
        self.c_pad = _round_up(max(backbone_channels, 128), 128)
        total = num_h_classes + 5 * num_bin_classes
        self.total = total
        self.total_pad = _round_up(total, 128)

        key = jax.random.PRNGKey(seed)
        ks = jax.random.split(key, 6)
        s = 0.02
        # backbone stem conv (torch layout Cout, Cin, KH, KW)
        self.conv_w = s * jax.random.normal(
            ks[0], (backbone_channels, in_channels, 3, 3), jnp.float32)
        self.conv_b = s * jax.random.normal(ks[1], (backbone_channels,), jnp.float32)
        # roi_h_heads classifier (person-H logits)
        h_w = s * jax.random.normal(ks[2], (backbone_channels, num_h_classes), jnp.float32)
        h_b = s * jax.random.normal(ks[3], (num_h_classes,), jnp.float32)
        # classifier_heads: horizon / pitch / roll / vfov / camH (fused)
        cls_w = s * jax.random.normal(
            ks[4], (backbone_channels, 5 * num_bin_classes), jnp.float32)
        cls_b = s * jax.random.normal(ks[5], (5 * num_bin_classes,), jnp.float32)

        # ---- kernel-ready parameter layouts (built once) ----
        # conv weights, tap-major K fold: row index = (dh*3 + dw)*Cin + c
        w_flat = jnp.transpose(self.conv_w, (2, 3, 1, 0)).reshape(
            9 * in_channels, backbone_channels)
        self.w_flat = jnp.pad(
            w_flat, ((0, 0), (0, self.c_pad - backbone_channels))).astype(jnp.bfloat16)
        self.bias = jnp.pad(self.conv_b, (0, self.c_pad - backbone_channels)
                            ).reshape(1, self.c_pad).astype(jnp.float32)
        # fused head: [person-H | horizon | pitch | roll | vfov | camH], padded to 384 lanes
        head_w = jnp.concatenate([h_w, cls_w], axis=1)                    # (Cb, total)
        head_w = jnp.pad(head_w, ((0, self.c_pad - backbone_channels),
                                  (0, self.total_pad - total)))
        self.head_w = head_w.astype(jnp.bfloat16)                         # (Cp, TOTp)
        head_b = jnp.concatenate([h_b, cls_b], axis=0)
        self.head_b = jnp.pad(head_b, (0, self.total_pad - total)
                              ).reshape(1, self.total_pad).astype(jnp.float32)

    def forward(self, images_nchw, bbox_lengths):
        """images_nchw: (B, Cin, H, W) f32; bbox_lengths: python list of boxes/image."""
        B, _, H, W = images_nchw.shape
        image_sizes_after_transform = [(W, H)] * B

        # ---- single fused pallas_call: conv+ReLU, GAP, heads, softmax ----
        feats_padded, pooled, all_logits, h_soft = fused_backbone_heads(
            images_nchw, self.w_flat, self.bias, self.head_w, self.head_b,
            self.num_h_classes)

        # TODO(synk): RPN proposal generation / ROIAlign / roi_bbox_heads box
        # regression + NMS have no clean dense Pallas equivalent; omitted here.

        nh, nb = self.num_h_classes, self.num_bin_classes
        h_logits = all_logits[:, :nh]

        # per-bbox gather AFTER the per-image softmax (identical rows per image)
        if sum(bbox_lengths) > 0:
            img_idx = np.concatenate(
                [np.full((n,), i, dtype=np.int32)
                 for i, n in enumerate(bbox_lengths)])
        else:
            img_idx = np.zeros((0,), dtype=np.int32)
        idx = jnp.asarray(img_idx)
        class_logits = jnp.take(h_logits, idx, axis=0)                    # (N_total, nh)
        class_logits_softmax = jnp.take(h_soft, idx, axis=0)
        splits = np.cumsum(bbox_lengths)[:-1].tolist()
        class_logits_softmax_list = jnp.split(class_logits_softmax, splits, axis=0)

        bins = all_logits[:, nh:nh + 5 * nb]
        return {
            'image_sizes_after_transform': image_sizes_after_transform,
            # lane-dense bf16 NHWC slab; real channels are [..., :num_feature_channels]
            'features': feats_padded,
            'num_feature_channels': self.backbone_channels,
            'pooled_features': pooled,
            'bbox_lengths': list(bbox_lengths),
            'class_person_H_logits': class_logits,
            'class_person_H_logits_softmax': class_logits_softmax,
            'class_person_H_logits_softmax_list': class_logits_softmax_list,
            'output_horizon': bins[:, 0 * nb:1 * nb],
            'output_pitch': bins[:, 1 * nb:2 * nb],
            'output_roll': bins[:, 2 * nb:3 * nb],
            'output_vfov': bins[:, 3 * nb:4 * nb],
            'output_camH': bins[:, 4 * nb:5 * nb],
        }


if __name__ == "__main__":
    key = jax.random.PRNGKey(0)
    B, Cin, H, W = 2, 3, 16, 16
    images = jax.random.normal(key, (B, Cin, H, W), jnp.float32)
    bbox_lengths = [3, 3]  # boxes per image (list_of_bbox_list lengths)

    model = GeneralizedRCNNPallas(in_channels=Cin, backbone_channels=32,
                                  num_h_classes=16, num_bin_classes=64, seed=0)
    out = model.forward(images, bbox_lengths)

    jax.block_until_ready(out['features'])
    jax.block_until_ready(out['class_person_H_logits_softmax'])
    jax.block_until_ready(out['output_horizon'])

    Cb = model.backbone_channels

    # ---- reference: f32 conv + ReLU on the bf16-rounded operands (same math as MXU) ----
    xb = images.astype(jnp.bfloat16).astype(jnp.float32)
    wb = model.conv_w.astype(jnp.bfloat16).astype(jnp.float32)
    ref = lax.conv_general_dilated(xb, wb, (1, 1), 'SAME',
                                   dimension_numbers=('NCHW', 'OIHW', 'NCHW'),
                                   precision=lax.Precision.HIGHEST)
    ref = jnp.maximum(ref + model.conv_b[None, :, None, None], 0.0)
    ref_nhwc = np.asarray(jnp.transpose(ref, (0, 2, 3, 1)))                # (B, H, W, Cb)

    feat = np.asarray(out['features'], dtype=np.float32)
    assert feat.shape == (B, H, W, model.c_pad)
    assert np.allclose(feat[..., :Cb], ref_nhwc, atol=2e-2)
    assert np.allclose(feat[..., Cb:], 0.0)

    # fused GAP matches the reference spatial mean; padded channels stay zero
    pooled = np.asarray(out['pooled_features'])
    assert np.allclose(pooled[:, :Cb], ref_nhwc.mean(axis=(1, 2)), atol=1e-3)
    assert np.allclose(pooled[:, Cb:], 0.0)

    # fused-head logits match a bf16 matmul on the returned pooled features
    ref_logits = np.asarray(
        jnp.dot(jnp.asarray(pooled).astype(jnp.bfloat16).astype(jnp.float32),
                model.head_w.astype(jnp.float32)) + model.head_b)
    nh, nb = model.num_h_classes, model.num_bin_classes
    assert np.allclose(np.asarray(out['output_horizon']),
                       ref_logits[:, nh:nh + nb], atol=1e-3)
    assert np.allclose(np.asarray(out['class_person_H_logits'][0]),
                       ref_logits[0, :nh], atol=1e-3)

    # softmax rows sum to 1 (exact divide in the kernel)
    row_sums = np.asarray(out['class_person_H_logits_softmax']).sum(axis=-1)
    assert np.allclose(row_sums, 1.0, atol=1e-4)

    assert out['class_person_H_logits'].shape == (sum(bbox_lengths), nh)
    assert out['output_camH'].shape == (B, nb)
    assert len(out['class_person_H_logits_softmax_list']) == B

    print("KERNEL_OK")
</pallas_src>

<mosaic_0001>
module attributes {stable_mosaic.version = 11 : i64} {
  func.func @_backbone_heads_kernel(%arg0: i32, %arg1: i32, %arg2: memref<1x18x18x3xbf16, #tpu.memory_space<vmem>>, %arg3: memref<27x128xbf16, #tpu.memory_space<vmem>>, %arg4: memref<1x128xf32, #tpu.memory_space<vmem>>, %arg5: memref<128x384xbf16, #tpu.memory_space<vmem>>, %arg6: memref<1x384xf32, #tpu.memory_space<vmem>>, %arg7: memref<1x8x16x128xbf16, #tpu.memory_space<vmem>>, %arg8: memref<1x1x128xf32, #tpu.memory_space<vmem>>, %arg9: memref<1x1x384xf32, #tpu.memory_space<vmem>>, %arg10: memref<1x1x16xf32, #tpu.memory_space<vmem>>) attributes {dimension_semantics = [#tpu.dimension_semantics<parallel>, #tpu.dimension_semantics<arbitrary>], iteration_bounds = array<i64: 2, 2>, scalar_prefetch = 0 : i64, scratch_operands = 0 : i64, tpu.core_type = #tpu.core_type<tc>, window_params = [{transform_indices = @transform_0, window_bounds = array<i64: 1, 18, 18, 3>}, {pipeline_mode = #tpu.pipeline_mode<synchronous>, transform_indices = @transform_1, window_bounds = array<i64: 27, 128>}, {pipeline_mode = #tpu.pipeline_mode<synchronous>, transform_indices = @transform_2, window_bounds = array<i64: 1, 128>}, {pipeline_mode = #tpu.pipeline_mode<synchronous>, transform_indices = @transform_3, window_bounds = array<i64: 128, 384>}, {pipeline_mode = #tpu.pipeline_mode<synchronous>, transform_indices = @transform_4, window_bounds = array<i64: 1, 384>}, {transform_indices = @transform_5, window_bounds = array<i64: 1, 8, 16, 128>}, {transform_indices = @transform_6, window_bounds = array<i64: 1, 1, 128>}, {transform_indices = @transform_7, window_bounds = array<i64: 1, 1, 384>}, {transform_indices = @transform_8, window_bounds = array<i64: 1, 1, 16>}]} {
    %c8_i32 = arith.constant 8 : i32
    %0 = arith.muli %arg1, %c8_i32 : i32
    %1 = tpu.assume_multiple %0, 8 : i32
    %c0 = arith.constant 0 : index
    %2 = arith.index_cast %1 : i32 to index
    %c0_0 = arith.constant 0 : index
    %c0_1 = arith.constant 0 : index
    %3 = vector.load %arg2[%c0, %2, %c0_0, %c0_1] : memref<1x18x18x3xbf16, #tpu.memory_space<vmem>>, vector<1x10x18x3xbf16>
    %4 = vector.shape_cast %3 : vector<1x10x18x3xbf16> to vector<10x18x3xbf16>
    %5 = vector.extract_strided_slice %4 {offsets = [0, 0, 0], sizes = [8, 16, 3], strides = [1, 1, 1]} : vector<10x18x3xbf16> to vector<8x16x3xbf16>
    %6 = vector.shape_cast %5 : vector<8x16x3xbf16> to vector<128x3xbf16>
    %7 = vector.extract_strided_slice %4 {offsets = [0, 1, 0], sizes = [8, 16, 3], strides = [1, 1, 1]} : vector<10x18x3xbf16> to vector<8x16x3xbf16>
    %8 = vector.shape_cast %7 : vector<8x16x3xbf16> to vector<128x3xbf16>
    %9 = vector.extract_strided_slice %4 {offsets = [0, 2, 0], sizes = [8, 16, 3], strides = [1, 1, 1]} : vector<10x18x3xbf16> to vector<8x16x3xbf16>
    %10 = vector.shape_cast %9 : vector<8x16x3xbf16> to vector<128x3xbf16>
    %11 = vector.extract_strided_slice %4 {offsets = [1, 0, 0], sizes = [8, 16, 3], strides = [1, 1, 1]} : vector<10x18x3xbf16> to vector<8x16x3xbf16>
    %12 = vector.shape_cast %11 : vector<8x16x3xbf16> to vector<128x3xbf16>
    %13 = vector.extract_strided_slice %4 {offsets = [1, 1, 0], sizes = [8, 16, 3], strides = [1, 1, 1]} : vector<10x18x3xbf16> to vector<8x16x3xbf16>
    %14 = vector.shape_cast %13 : vector<8x16x3xbf16> to vector<128x3xbf16>
    %15 = vector.extract_strided_slice %4 {offsets = [1, 2, 0], sizes = [8, 16, 3], strides = [1, 1, 1]} : vector<10x18x3xbf16> to vector<8x16x3xbf16>
    %16 = vector.shape_cast %15 : vector<8x16x3xbf16> to vector<128x3xbf16>
    %17 = vector.extract_strided_slice %4 {offsets = [2, 0, 0], sizes = [8, 16, 3], strides = [1, 1, 1]} : vector<10x18x3xbf16> to vector<8x16x3xbf16>
    %18 = vector.shape_cast %17 : vector<8x16x3xbf16> to vector<128x3xbf16>
    %19 = vector.extract_strided_slice %4 {offsets = [2, 1, 0], sizes = [8, 16, 3], strides = [1, 1, 1]} : vector<10x18x3xbf16> to vector<8x16x3xbf16>
    %20 = vector.shape_cast %19 : vector<8x16x3xbf16> to vector<128x3xbf16>
    %21 = vector.extract_strided_slice %4 {offsets = [2, 2, 0], sizes = [8, 16, 3], strides = [1, 1, 1]} : vector<10x18x3xbf16> to vector<8x16x3xbf16>
    %22 = vector.shape_cast %21 : vector<8x16x3xbf16> to vector<128x3xbf16>
    %23 = tpu.concatenate %6, %8, %10, %12, %14, %16, %18, %20, %22 in 1 : vector<128x3xbf16>, vector<128x3xbf16>, vector<128x3xbf16>, vector<128x3xbf16>, vector<128x3xbf16>, vector<128x3xbf16>, vector<128x3xbf16>, vector<128x3xbf16>, vector<128x3xbf16> -> vector<128x27xbf16>
    %c0_2 = arith.constant 0 : index
    %c0_3 = arith.constant 0 : index
    %24 = vector.load %arg3[%c0_2, %c0_3] : memref<27x128xbf16, #tpu.memory_space<vmem>>, vector<27x128xbf16>
    %cst = arith.constant dense<0.000000e+00> : vector<128x128xf32>
    %25 = tpu.matmul %23, %24, %cst {dimension_numbers = #tpu.dot_dimension_numbers<[1], [0], [0], [1], [0, 0, 1, 1], [], []>} : vector<128x27xbf16>, vector<27x128xbf16>, vector<128x128xf32> -> vector<128x128xf32>
    %c0_4 = arith.constant 0 : index
    %c0_5 = arith.constant 0 : index
    %26 = vector.load %arg4[%c0_4, %c0_5] : memref<1x128xf32, #tpu.memory_space<vmem>>, vector<1x128xf32>
    %27 = vector.broadcast %26 : vector<1x128xf32> to vector<128x128xf32>
    %28 = arith.addf %25, %27 : vector<128x128xf32>
    %cst_6 = arith.constant 0.000000e+00 : f32
    %29 = vector.broadcast %cst_6 : f32 to vector<128x128xf32>
    %30 = arith.maximumf %28, %29 : vector<128x128xf32>
    %31 = vector.shape_cast %30 : vector<128x128xf32> to vector<8x16x128xf32>
    %32 = arith.truncf %31 : vector<8x16x128xf32> to vector<8x16x128xbf16>
    %c0_7 = arith.constant 0 : index
    %c0_8 = arith.constant 0 : index
    %c0_9 = arith.constant 0 : index
    %c0_10 = arith.constant 0 : index
    %33 = vector.load %arg7[%c0_7, %c0_8, %c0_9, %c0_10] : memref<1x8x16x128xbf16, #tpu.memory_space<vmem>>, vector<1x8x16x128xbf16>
    %34 = vector.shape_cast %33 : vector<1x8x16x128xbf16> to vector<8x16x128xbf16>
    %35 = vector.shape_cast %32 : vector<8x16x128xbf16> to vector<1x8x16x128xbf16>
    tpu.vector_store %arg7[%c0_7, %c0_8, %c0_9, %c0_10], %35 {strides = array<i32>} : memref<1x8x16x128xbf16, #tpu.memory_space<vmem>>, vector<1x8x16x128xbf16>,
    %c0_i32 = arith.constant 0 : i32
    %36 = arith.cmpi eq, %arg1, %c0_i32 : i32
    %37 = arith.extui %36 : i1 to i32
    %c0_i32_11 = arith.constant 0 : i32
    %38 = arith.cmpi ne, %37, %c0_i32_11 : i32
    scf.if %38 {
      %cst_20 = arith.constant 0.000000e+00 : f32
      %50 = vector.broadcast %cst_20 : f32 to vector<1x128xf32>
      %c0_21 = arith.constant 0 : index
      %c0_22 = arith.constant 0 : index
      %c0_23 = arith.constant 0 : index
      %51 = vector.load %arg8[%c0_21, %c0_22, %c0_23] : memref<1x1x128xf32, #tpu.memory_space<vmem>>, vector<1x1x128xf32>
      %52 = vector.shape_cast %51 : vector<1x1x128xf32> to vector<1x128xf32>
      %53 = vector.shape_cast %50 : vector<1x128xf32> to vector<1x1x128xf32>
      tpu.vector_store %arg8[%c0_21, %c0_22, %c0_23], %53 {strides = array<i32>} : memref<1x1x128xf32, #tpu.memory_space<vmem>>, vector<1x1x128xf32>,
    } else {
    }
    %c0_12 = arith.constant 0 : index
    %c0_13 = arith.constant 0 : index
    %c0_14 = arith.constant 0 : index
    %39 = vector.load %arg8[%c0_12, %c0_13, %c0_14] : memref<1x1x128xf32, #tpu.memory_space<vmem>>, vector<1x1x128xf32>
    %40 = vector.shape_cast %39 : vector<1x1x128xf32> to vector<1x128xf32>
    %cst_15 = arith.constant dense<0.000000e+00> : vector<128xf32>
    %41 = vector.multi_reduction <add>, %30, %cst_15 [0] : vector<128x128xf32> to vector<128xf32>
    %42 = vector.shape_cast %41 : vector<128xf32> to vector<1x128xf32>
    %43 = arith.addf %40, %42 : vector<1x128xf32>
    %c0_16 = arith.constant 0 : index
    %c0_17 = arith.constant 0 : index
    %c0_18 = arith.constant 0 : index
    %44 = vector.load %arg8[%c0_16, %c0_17, %c0_18] : memref<1x1x128xf32, #tpu.memory_space<vmem>>, vector<1x1x128xf32>
    %45 = vector.shape_cast %44 : vector<1x1x128xf32> to vector<1x128xf32>
    %46 = vector.shape_cast %43 : vector<1x128xf32> to vector<1x1x128xf32>
    tpu.vector_store %arg8[%c0_16, %c0_17, %c0_18], %46 {strides = array<i32>} : memref<1x1x128xf32, #tpu.memory_space<vmem>>, vector<1x1x128xf32>,
    %c1_i32 = arith.constant 1 : i32
    %47 = arith.cmpi eq, %arg1, %c1_i32 : i32
    %48 = arith.extui %47 : i1 to i32
    %c0_i32_19 = arith.constant 0 : i32
    %49 = arith.cmpi ne, %48, %c0_i32_19 : i32
    scf.if %49 {
      %c0_20 = arith.constant 0 : index
      %c0_21 = arith.constant 0 : index
      %c0_22 = arith.constant 0 : index
      %50 = vector.load %arg8[%c0_20, %c0_21, %c0_22] : memref<1x1x128xf32, #tpu.memory_space<vmem>>, vector<1x1x128xf32>
      %51 = vector.shape_cast %50 : vector<1x1x128xf32> to vector<1x128xf32>
      %cst_23 = arith.constant 3.906250e-03 : f32
      %52 = vector.broadcast %cst_23 : f32 to vector<1x128xf32>
      %53 = arith.mulf %51, %52 : vector<1x128xf32>
      %c0_24 = arith.constant 0 : index
      %c0_25 = arith.constant 0 : index
      %c0_26 = arith.constant 0 : index
      %54 = vector.load %arg8[%c0_24, %c0_25, %c0_26] : memref<1x1x128xf32, #tpu.memory_space<vmem>>, vector<1x1x128xf32>
      %55 = vector.shape_cast %54 : vector<1x1x128xf32> to vector<1x128xf32>
      %56 = vector.shape_cast %53 : vector<1x128xf32> to vector<1x1x128xf32>
      tpu.vector_store %arg8[%c0_24, %c0_25, %c0_26], %56 {strides = array<i32>} : memref<1x1x128xf32, #tpu.memory_space<vmem>>, vector<1x1x128xf32>,
      %57 = arith.truncf %53 : vector<1x128xf32> to vector<1x128xbf16>
      %c0_27 = arith.constant 0 : index
      %c0_28 = arith.constant 0 : index
      %58 = vector.load %arg5[%c0_27, %c0_28] : memref<128x384xbf16, #tpu.memory_space<vmem>>, vector<128x384xbf16>
      %cst_29 = arith.constant dense<0.000000e+00> : vector<1x384xf32>
      %59 = tpu.matmul %57, %58, %cst_29 {dimension_numbers = #tpu.dot_dimension_numbers<[1], [0], [0], [1], [0, 0, 1, 1], [], []>} : vector<1x128xbf16>, vector<128x384xbf16>, vector<1x384xf32> -> vector<1x384xf32>
      %c0_30 = arith.constant 0 : index
      %c0_31 = arith.constant 0 : index
      %60 = vector.load %arg6[%c0_30, %c0_31] : memref<1x384xf32, #tpu.memory_space<vmem>>, vector<1x384xf32>
      %61 = arith.addf %59, %60 : vector<1x384xf32>
      %c0_32 = arith.constant 0 : index
      %c0_33 = arith.constant 0 : index
      %c0_34 = arith.constant 0 : index
      %62 = vector.load %arg9[%c0_32, %c0_33, %c0_34] : memref<1x1x384xf32, #tpu.memory_space<vmem>>, vector<1x1x384xf32>
      %63 = vector.shape_cast %62 : vector<1x1x384xf32> to vector<1x384xf32>
      %64 = vector.shape_cast %61 : vector<1x384xf32> to vector<1x1x384xf32>
      tpu.vector_store %arg9[%c0_32, %c0_33, %c0_34], %64 {strides = array<i32>} : memref<1x1x384xf32, #tpu.memory_space<vmem>>, vector<1x1x384xf32>,
      %65 = vector.extract_strided_slice %61 {offsets = [0, 0], sizes = [1, 16], strides = [1, 1]} : vector<1x384xf32> to vector<1x16xf32>
      %cst_35 = arith.constant dense<0xFF800000> : vector<1xf32>
      %66 = vector.multi_reduction <maximumf>, %65, %cst_35 [1] : vector<1x16xf32> to vector<1xf32>
      %67 = vector.shape_cast %66 : vector<1xf32> to vector<1x1xf32>
      %68 = vector.broadcast %67 : vector<1x1xf32> to vector<1x16xf32>
      %69 = arith.subf %65, %68 : vector<1x16xf32>
      %70 = math.exp %69 : vector<1x16xf32>
      %cst_36 = arith.constant dense<0.000000e+00> : vector<1xf32>
      %71 = vector.multi_reduction <add>, %70, %cst_36 [1] : vector<1x16xf32> to vector<1xf32>
      %72 = vector.shape_cast %71 : vector<1xf32> to vector<1x1xf32>
      %73 = vector.broadcast %72 : vector<1x1xf32> to vector<1x16xf32>
      %74 = arith.divf %70, %73 : vector<1x16xf32>
      %c0_37 = arith.constant 0 : index
      %c0_38 = arith.constant 0 : index
      %c0_39 = arith.constant 0 : index
      %75 = vector.load %arg10[%c0_37, %c0_38, %c0_39] : memref<1x1x16xf32, #tpu.memory_space<vmem>>, vector<1x1x16xf32>
      %76 = vector.shape_cast %75 : vector<1x1x16xf32> to vector<1x16xf32>
      %77 = vector.shape_cast %74 : vector<1x16xf32> to vector<1x1x16xf32>
      tpu.vector_store %arg10[%c0_37, %c0_38, %c0_39], %77 {strides = array<i32>} : memref<1x1x16xf32, #tpu.memory_space<vmem>>, vector<1x1x16xf32>,
    } else {
    }
    return
  }
  func.func @transform_0(%arg0: i32, %arg1: i32) -> (i32, i32, i32, i32) {
    %c0_i32 = arith.constant 0 : i32
    %c0_i32_0 = arith.constant 0 : i32
    %c0_i32_1 = arith.constant 0 : i32
    %c0_i32_2 = arith.constant 0 : i32
    return %arg0, %c0_i32, %c0_i32_0, %c0_i32_1 : i32, i32, i32, i32
  }
  func.func @transform_1(%arg0: i32, %arg1: i32) -> (i32, i32) {
    %c0_i32 = arith.constant 0 : i32
    %c0_i32_0 = arith.constant 0 : i32
    %c0_i32_1 = arith.constant 0 : i32
    return %c0_i32, %c0_i32_0 : i32, i32
  }
  func.func @transform_2(%arg0: i32, %arg1: i32) -> (i32, i32) {
    %c0_i32 = arith.constant 0 : i32
    %c0_i32_0 = arith.constant 0 : i32
    %c0_i32_1 = arith.constant 0 : i32
    return %c0_i32, %c0_i32_0 : i32, i32
  }
  func.func @transform_3(%arg0: i32, %arg1: i32) -> (i32, i32) {
    %c0_i32 = arith.constant 0 : i32
    %c0_i32_0 = arith.constant 0 : i32
    %c0_i32_1 = arith.constant 0 : i32
    return %c0_i32, %c0_i32_0 : i32, i32
  }
  func.func @transform_4(%arg0: i32, %arg1: i32) -> (i32, i32) {
    %c0_i32 = arith.constant 0 : i32
    %c0_i32_0 = arith.constant 0 : i32
    %c0_i32_1 = arith.constant 0 : i32
    return %c0_i32, %c0_i32_0 : i32, i32
  }
  func.func @transform_5(%arg0: i32, %arg1: i32) -> (i32, i32, i32, i32) {
    %c0_i32 = arith.constant 0 : i32
    %c0_i32_0 = arith.constant 0 : i32
    %c0_i32_1 = arith.constant 0 : i32
    return %arg0, %arg1, %c0_i32, %c0_i32_0 : i32, i32, i32, i32
  }
  func.func @transform_6(%arg0: i32, %arg1: i32) -> (i32, i32, i32) {
    %c0_i32 = arith.constant 0 : i32
    %c0_i32_0 = arith.constant 0 : i32
    %c0_i32_1 = arith.constant 0 : i32
    return %arg0, %c0_i32, %c0_i32_0 : i32, i32, i32
  }
  func.func @transform_7(%arg0: i32, %arg1: i32) -> (i32, i32, i32) {
    %c0_i32 = arith.constant 0 : i32
    %c0_i32_0 = arith.constant 0 : i32
    %c0_i32_1 = arith.constant 0 : i32
    return %arg0, %c0_i32, %c0_i32_0 : i32, i32, i32
  }
  func.func @transform_8(%arg0: i32, %arg1: i32) -> (i32, i32, i32) {
    %c0_i32 = arith.constant 0 : i32
    %c0_i32_0 = arith.constant 0 : i32
    %c0_i32_1 = arith.constant 0 : i32
    return %arg0, %c0_i32, %c0_i32_0 : i32, i32, i32
  }
}

</mosaic_0001>

<llo_original>
// kernel: tpu_custom_call.1
$region0: #{tpu_custom_call.1}
  #allocation0 [shape = 'u32[]', space=smem, size = 0x4, offset = 0x4, fixed_abs, tag = 'smem constant byte address 0x4 - core index']
  #allocation1 [shape = 'u32[72,128]{1,0:T(1,128)}', space=vmem, size = 0x9000, scoped, tag = 'internal scratch']
  %s0 = inlined_call_operand.vmem [shape: bf16[2,18,18,3], index: 0, kind: input, shape index: {}]
  %s1 = inlined_call_operand.vmem [shape: bf16[27,128], index: 1, kind: input, shape index: {}]
  %s2 = inlined_call_operand.vmem [shape: f32[1,128], index: 2, kind: input, shape index: {}]
  %s3 = inlined_call_operand.vmem [shape: bf16[128,384], index: 3, kind: input, shape index: {}]
  %s4 = inlined_call_operand.vmem [shape: f32[1,384], index: 4, kind: input, shape index: {}]
  %s5 = inlined_call_operand.hbm [shape: bf16[2,16,16,128], index: 5, kind: output, shape index: {0}]
  %s6 = inlined_call_operand.hbm [shape: f32[2,1,128], index: 6, kind: output, shape index: {1}]
  %s7 = inlined_call_operand.hbm [shape: f32[2,1,384], index: 7, kind: output, shape index: {2}]
  %s8 = inlined_call_operand.hbm [shape: f32[2,1,16], index: 8, kind: output, shape index: {3}]
  %9 = xla_tuple %s5, %s6, %s7, %s8
  %s10 = sld [smem:[#allocation0]]
  $region85: #{tpu_custom_call.1} parent=0
    _
  %s12 = ssub.s32 1, %s10
  %s13 = scalar_select 0, %s12, %s10
  $region1: #{tpu_custom_call.1} parent=0
    #allocation2 [shape = 'u8[65536]{0}', space=vmem, size = 0x10000, scoped, tag = 'output window, operand 0']
    #allocation3 [shape = 's32[2]{0}', space=sflag, size = 0x8, scoped, tag = 'scoped memory for tpu_custom_call.1']
    #allocation4 [shape = 'u8[1024]{0}', space=vmem, size = 0x400, scoped, tag = 'output window, operand 1']
    #allocation5 [shape = 's32[2]{0}', space=sflag, size = 0x8, scoped, tag = 'scoped memory for tpu_custom_call.1']
    #allocation6 [shape = 'u8[3072]{0}', space=vmem, size = 0xc00, scoped, tag = 'output window, operand 2']
    #allocation7 [shape = 'u8[1024]{0}', space=vmem, size = 0x400, scoped, tag = 'output window, operand 3']
    #allocation8 [shape = 's32[2]{0}', space=sflag, size = 0x8, scoped, tag = 'scoped memory for tpu_custom_call.1']
    %14 = vsyncpa [#allocation3], 0
    %s15 = scalar_lea.sflag [#allocation3], 1
    %16 = vsyncpa %s15, 0
    %17 = vsyncpa [#allocation5], 0
    %s18 = scalar_lea.sflag [#allocation5], 1
    %19 = vsyncpa %s18, 0
    %20 = vsyncpa [#allocation8], 0
    %s21 = scalar_lea.sflag [#allocation8], 1
    %22 = vsyncpa %s21, 0
    loop: start=0, step=1, limit=6
    $region2: #{tpu_custom_call.1} parent=1 // loop_pre_header
      _
    $region3: #{tpu_custom_call.1} parent=1 // loop_header
      %s24 = sphi 0, %s28
      %p25 = scmp.ge.s32.totalorder %s24, 6
      %s31 = sphi 0, %s43
      %s32 = sphi 0, %s39
      %s33 = sphi 0, %s31
      %s34 = sphi 0, %s32
      %s35 = sphi 0, %s33
      %s36 = sphi 0, %s34
      %s46 = sphi 0, %s48
      %s49 = sphi 0, %s46
      %s50 = sphi 0, %s49
      %s66 = sphi 0, %s50
      %s70 = sphi 0, %s70
      %s72 = sphi 0, %s70
      %s73 = sphi 0, %s72
      %s87 = sphi 0, %s73
      %s91 = sphi 0, %s91
      %s93 = sphi 0, %s91
      %s94 = sphi 0, %s93
      %s108 = sphi 0, %s94
      %s112 = sphi 0, %s112
      %s114 = sphi 0, %s112
      %s115 = sphi 0, %s114
      %s129 = sphi 0, %s115
      %s133 = sphi 0, %s133
      %s135 = sphi 0, %s133
      %s136 = sphi 0, %s135
      %s150 = sphi 0, %s136
      %s158 = sphi 0, %s160
      %s161 = sphi 0, %s158
      %s162 = sphi 0, %s161
      %s178 = sphi 0, %s162
      %s184 = sphi 0, %s186
      %s187 = sphi 0, %s184
      %s188 = sphi 0, %s187
      %s204 = sphi 0, %s188
      %s210 = sphi 0, %s212
      %s213 = sphi 0, %s210
      %s214 = sphi 0, %s213
      %s230 = sphi 0, %s214
      %s236 = sphi 0, %s238
      %s239 = sphi 0, %s236
      %s240 = sphi 0, %s239
      %s256 = sphi 0, %s240
    $region4: #{tpu_custom_call.1} parent=1 // loop_header_branch
      %27 = sbr.rel (%p25) target = $region8
    $region5: #{tpu_custom_call.1} parent=1 // loop_body
      %s29 = ssub.s32 %s24, 1
      %s30 = ssub.s32 %s24, 2
      %s37 = sadd.s32 1, %s32
      %p38 = scmp.ge.s32.totalorder %s37, 2
      %s39 = scalar_select %p38, 0, %s37
      %s40 = sadd.s32 1, %s31
      %s41 = scalar_select %p38, %s40, %s31
      %p42 = scmp.ge.s32.totalorder %s41, 2
      %s43 = scalar_select %p42, 0, %s41
      %s44 = ssub.s32 %s31, %s43
      %p45 = scmp.eq.s32.totalorder %s44, 0
      %s47 = sadd.s32 %s46, 1
      %s48 = scalar_select %p45, %s46, %s47
      %p51 = pneg %p45
      %p52 = scmp.eq.s32.totalorder %s24, 3
      %p53 = por %p51, %p52
      %p54 = scmp.ne.s32.totalorder %s46, %s49
      %p55 = scmp.eq.s32.totalorder %s24, 0
      %p56 = por %p54, %p55
      %p57 = scmp.ne.s32.totalorder %s46, %s49
      %p58 = scmp.eq.s32.totalorder %s29, 3
      %p59 = por %p57, %p58
      %p60 = scmp.ne.s32.totalorder %s49, %s50
      %p61 = scmp.eq.s32.totalorder %s29, 0
      %p62 = por %p60, %p61
      %p63 = scmp.ne.s32.totalorder %s49, %s50
      %p64 = scmp.eq.s32.totalorder %s30, 3
      %p65 = por %p63, %p64
      %p67 = scmp.ne.s32.totalorder %s50, %s66
      %p68 = scmp.eq.s32.totalorder %s30, 0
      %p69 = por %p67, %p68
      %s71 = sadd.s32 %s70, 1
      %p74 = scmp.eq.s32.totalorder %s24, 3
      %p75 = scmp.ne.s32.totalorder %s70, %s72
      %p76 = scmp.eq.s32.totalorder %s24, 0
      %p77 = por %p75, %p76
      %p78 = scmp.ne.s32.totalorder %s70, %s72
      %p79 = scmp.eq.s32.totalorder %s29, 3
      %p80 = por %p78, %p79
      %p81 = scmp.ne.s32.totalorder %s72, %s73
      %p82 = scmp.eq.s32.totalorder %s29, 0
      %p83 = por %p81, %p82
      %p84 = scmp.ne.s32.totalorder %s72, %s73
      %p85 = scmp.eq.s32.totalorder %s30, 3
      %p86 = por %p84, %p85
      %p88 = scmp.ne.s32.totalorder %s73, %s87
      %p89 = scmp.eq.s32.totalorder %s30, 0
      %p90 = por %p88, %p89
      %s92 = sadd.s32 %s91, 1
      %p95 = scmp.eq.s32.totalorder %s24, 3
      %p96 = scmp.ne.s32.totalorder %s91, %s93
      %p97 = scmp.eq.s32.totalorder %s24, 0
      %p98 = por %p96, %p97
      %p99 = scmp.ne.s32.totalorder %s91, %s93
      %p100 = scmp.eq.s32.totalorder %s29, 3
      %p101 = por %p99, %p100
      %p102 = scmp.ne.s32.totalorder %s93, %s94
      %p103 = scmp.eq.s32.totalorder %s29, 0
      %p104 = por %p102, %p103
      %p105 = scmp.ne.s32.totalorder %s93, %s94
      %p106 = scmp.eq.s32.totalorder %s30, 3
      %p107 = por %p105, %p106
      %p109 = scmp.ne.s32.totalorder %s94, %s108
      %p110 = scmp.eq.s32.totalorder %s30, 0
      %p111 = por %p109, %p110
      %s113 = sadd.s32 %s112, 1
      %p116 = scmp.eq.s32.totalorder %s24, 3
      %p117 = scmp.ne.s32.totalorder %s112, %s114
      %p118 = scmp.eq.s32.totalorder %s24, 0
      %p119 = por %p117, %p118
      %p120 = scmp.ne.s32.totalorder %s112, %s114
      %p121 = scmp.eq.s32.totalorder %s29, 3
      %p122 = por %p120, %p121
      %p123 = scmp.ne.s32.totalorder %s114, %s115
      %p124 = scmp.eq.s32.totalorder %s29, 0
      %p125 = por %p123, %p124
      %p126 = scmp.ne.s32.totalorder %s114, %s115
      %p127 = scmp.eq.s32.totalorder %s30, 3
      %p128 = por %p126, %p127
      %p130 = scmp.ne.s32.totalorder %s115, %s129
      %p131 = scmp.eq.s32.totalorder %s30, 0
      %p132 = por %p130, %p131
      %s134 = sadd.s32 %s133, 1
      %p137 = scmp.eq.s32.totalorder %s24, 3
      %p138 = scmp.ne.s32.totalorder %s133, %s135
      %p139 = scmp.eq.s32.totalorder %s24, 0
      %p140 = por %p138, %p139
      %p141 = scmp.ne.s32.totalorder %s133, %s135
      %p142 = scmp.eq.s32.totalorder %s29, 3
      %p143 = por %p141, %p142
      %p144 = scmp.ne.s32.totalorder %s135, %s136
      %p145 = scmp.eq.s32.totalorder %s29, 0
      %p146 = por %p144, %p145
      %p147 = scmp.ne.s32.totalorder %s135, %s136
      %p148 = scmp.eq.s32.totalorder %s30, 3
      %p149 = por %p147, %p148
      %p151 = scmp.ne.s32.totalorder %s136, %s150
      %p152 = scmp.eq.s32.totalorder %s30, 0
      %p153 = por %p151, %p152
      %s154 = ssub.s32 %s31, %s43
      %s155 = ssub.s32 %s32, %s39
      %s156 = sor.u32 %s154, %s155
      %p157 = scmp.eq.s32.totalorder %s156, 0
      %s159 = sadd.s32 %s158, 1
      %s160 = scalar_select %p157, %s158, %s159
      %p163 = pneg %p157
      %p164 = scmp.eq.s32.totalorder %s24, 3
      %p165 = por %p163, %p164
      %p166 = scmp.ne.s32.totalorder %s158, %s161
      %p167 = scmp.eq.s32.totalorder %s24, 0
      %p168 = por %p166, %p167
      %p169 = scmp.ne.s32.totalorder %s158, %s161
      %p170 = scmp.eq.s32.totalorder %s29, 3
      %p171 = por %p169, %p170
      %p172 = scmp.ne.s32.totalorder %s161, %s162
      %p173 = scmp.eq.s32.totalorder %s29, 0
      %p174 = por %p172, %p173
      %p175 = scmp.ne.s32.totalorder %s161, %s162
      %p176 = scmp.eq.s32.totalorder %s30, 3
      %p177 = por %p175, %p176
      %p179 = scmp.ne.s32.totalorder %s162, %s178
      %p180 = scmp.eq.s32.totalorder %s30, 0
      %p181 = por %p179, %p180
      %s182 = ssub.s32 %s31, %s43
      %p183 = scmp.eq.s32.totalorder %s182, 0
      %s185 = sadd.s32 %s184, 1
      %s186 = scalar_select %p183, %s184, %s185
      %p189 = pneg %p183
      %p190 = scmp.eq.s32.totalorder %s24, 3
      %p191 = por %p189, %p190
      %p192 = scmp.ne.s32.totalorder %s184, %s187
      %p193 = scmp.eq.s32.totalorder %s24, 0
      %p194 = por %p192, %p193
      %p195 = scmp.ne.s32.totalorder %s184, %s187
      %p196 = scmp.eq.s32.totalorder %s29, 3
      %p197 = por %p195, %p196
      %p198 = scmp.ne.s32.totalorder %s187, %s188
      %p199 = scmp.eq.s32.totalorder %s29, 0
      %p200 = por %p198, %p199
      %p201 = scmp.ne.s32.totalorder %s187, %s188
      %p202 = scmp.eq.s32.totalorder %s30, 3
      %p203 = por %p201, %p202
      %p205 = scmp.ne.s32.totalorder %s188, %s204
      %p206 = scmp.eq.s32.totalorder %s30, 0
      %p207 = por %p205, %p206
      %s208 = ssub.s32 %s31, %s43
      %p209 = scmp.eq.s32.totalorder %s208, 0
      %s211 = sadd.s32 %s210, 1
      %s212 = scalar_select %p209, %s210, %s211
      %p215 = pneg %p209
      %p216 = scmp.eq.s32.totalorder %s24, 3
      %p217 = por %p215, %p216
      %p218 = scmp.ne.s32.totalorder %s210, %s213
      %p219 = scmp.eq.s32.totalorder %s24, 0
      %p220 = por %p218, %p219
      %p221 = scmp.ne.s32.totalorder %s210, %s213
      %p222 = scmp.eq.s32.totalorder %s29, 3
      %p223 = por %p221, %p222
      %p224 = scmp.ne.s32.totalorder %s213, %s214
      %p225 = scmp.eq.s32.totalorder %s29, 0
      %p226 = por %p224, %p225
      %p227 = scmp.ne.s32.totalorder %s213, %s214
      %p228 = scmp.eq.s32.totalorder %s30, 3
      %p229 = por %p227, %p228
      %p231 = scmp.ne.s32.totalorder %s214, %s230
      %p232 = scmp.eq.s32.totalorder %s30, 0
      %p233 = por %p231, %p232
      %s234 = ssub.s32 %s31, %s43
      %p235 = scmp.eq.s32.totalorder %s234, 0
      %s237 = sadd.s32 %s236, 1
      %s238 = scalar_select %p235, %s236, %s237
      %p241 = pneg %p235
      %p242 = scmp.eq.s32.totalorder %s24, 3
      %p243 = por %p241, %p242
      %p244 = scmp.ne.s32.totalorder %s236, %s239
      %p245 = scmp.eq.s32.totalorder %s24, 0
      %p246 = por %p244, %p245
      %p247 = scmp.ne.s32.totalorder %s236, %s239
      %p248 = scmp.eq.s32.totalorder %s29, 3
      %p249 = por %p247, %p248
      %p250 = scmp.ne.s32.totalorder %s239, %s240
      %p251 = scmp.eq.s32.totalorder %s29, 0
      %p252 = por %p250, %p251
      %p253 = scmp.ne.s32.totalorder %s239, %s240
      %p254 = scmp.eq.s32.totalorder %s30, 3
      %p255 = por %p253, %p254
      %p257 = scmp.ne.s32.totalorder %s240, %s256
      %p258 = scmp.eq.s32.totalorder %s30, 0
      %p259 = por %p257, %p258
      %p260 = scmp.le.s32.totalorder 1, %s24
      %p261 = scmp.lt.s32.totalorder %s24, 5
      %p262 = pnand %p260, %p261
      %p263 = pneg %p262
      // Predicated region
      $region9: #{tpu_custom_call.1} parent=5 // pred_check
        _
      $region10: #{tpu_custom_call.1} parent=5 // pred_check_branch
        %265 = sbr.rel (%p262) target = $region12
      $region11: #{tpu_custom_call.1} parent=5 // pred_region
        %s266 = ssub.s32 %s24, 1
        // Predicated region
        $region13: #{tpu_custom_call.1} parent=11 // pred_check
          %p267 = pneg %p83
        $region14: #{tpu_custom_call.1} parent=11 // pred_check_branch
          %269 = sbr.rel (%p267) target = $region16
        $region15: #{tpu_custom_call.1} parent=11 // pred_region
          _
        $region16: #{tpu_custom_call.1} parent=11 // pred_fallthru
          _
        // Predicated region
        $region17: #{tpu_custom_call.1} parent=11 // pred_check
          %p270 = pneg %p104
        $region18: #{tpu_custom_call.1} parent=11 // pred_check_branch
          %272 = sbr.rel (%p270) target = $region20
        $region19: #{tpu_custom_call.1} parent=11 // pred_region
          _
        $region20: #{tpu_custom_call.1} parent=11 // pred_fallthru
          _
        // Predicated region
        $region21: #{tpu_custom_call.1} parent=11 // pred_check
          %p273 = pneg %p125
        $region22: #{tpu_custom_call.1} parent=11 // pred_check_branch
          %275 = sbr.rel (%p273) target = $region24
        $region23: #{tpu_custom_call.1} parent=11 // pred_region
          _
        $region24: #{tpu_custom_call.1} parent=11 // pred_fallthru
          _
        // Predicated region
        $region25: #{tpu_custom_call.1} parent=11 // pred_check
          %p276 = pneg %p146
        $region26: #{tpu_custom_call.1} parent=11 // pred_check_branch
          %278 = sbr.rel (%p276) target = $region28
        $region27: #{tpu_custom_call.1} parent=11 // pred_region
          _
        $region28: #{tpu_custom_call.1} parent=11 // pred_fallthru
          _
      $region12: #{tpu_custom_call.1} parent=5 // pred_fallthru
        _
      %p279 = scmp.lt.s32.totalorder %s24, 4
      // Predicated region
      $region29: #{tpu_custom_call.1} parent=5 // pred_check
        %p280 = pneg %p279
      $region30: #{tpu_custom_call.1} parent=5 // pred_check_branch
        %282 = sbr.rel (%p280) target = $region32
      $region31: #{tpu_custom_call.1} parent=5 // pred_region
        // Predicated region
        $region33: #{tpu_custom_call.1} parent=31 // pred_check
          %p283 = pneg %p56
        $region34: #{tpu_custom_call.1} parent=31 // pred_check_branch
          %285 = sbr.rel (%p283) target = $region36
        $region35: #{tpu_custom_call.1} parent=31 // pred_region
          %p286 = scmp.lt.s32.totalorder %s31, 1
          %s287 = scalar_select %p286, %s31, 1
          %s288 = smul.addr %s287, 54
          %s289 = smul.addr %s288, 4
          %s290 = scalar_lea.vmem %s0, %s289
        $region36: #{tpu_custom_call.1} parent=31 // pred_fallthru
          _
      $region32: #{tpu_custom_call.1} parent=5 // pred_fallthru
        _
      %p291 = scmp.le.s32.totalorder 1, %s24
      %p292 = scmp.lt.s32.totalorder %s24, 5
      %p293 = pnand %p291, %p292
      %p294 = pneg %p293
      // Predicated region
      $region37: #{tpu_custom_call.1} parent=5 // pred_check
        _
      $region38: #{tpu_custom_call.1} parent=5 // pred_check_branch
        %296 = sbr.rel (%p293) target = $region40
      $region39: #{tpu_custom_call.1} parent=5 // pred_region
        %s297 = ssub.s32 %s24, 1
        %p298 = scmp.lt.s32.totalorder %s33, 1
        %s299 = scalar_select %p298, %s33, 1
        %s300 = smul.addr %s299, 54
        %s301 = smul.addr %s300, 4
        %s302 = scalar_lea.vmem %s0, %s301
        %p303 = pneg %p62
        %p304 = pneg %p59
        %p305 = pneg %p83
        %p306 = pneg %p80
        %p307 = pneg %p104
        %p308 = pneg %p101
        %p309 = pneg %p125
        %p310 = pneg %p122
        %p311 = pneg %p146
        %p312 = pneg %p143
        %p313 = pneg %p174
        %p314 = pneg %p171
        %s315 = sand.u32 %s161, 1
        %s316 = scalar_lea.sflag [#allocation3], %s315
        %s317 = sand.u32 %s161, 1
        %s318 = smul.addr %s317, 64
        %s319 = scalar_lea.vmem [#allocation2], %s318
        %p320 = pneg %p200
        %p321 = pneg %p197
        %s322 = sand.u32 %s29, 1
        %s323 = scalar_lea.sflag [#allocation5], %s322
        %s324 = sand.u32 %s187, 1
        %s325 = scalar_lea.vmem [#allocation4], %s324
        %p326 = pneg %p226
        %p327 = pneg %p223
        %s328 = sand.u32 %s29, 1
        %s329 = scalar_lea.sflag [#allocation5], %s328
        %s330 = sand.u32 %s213, 1
        %s331 = smul.addr %s330, 3
        %s332 = scalar_lea.vmem [#allocation6], %s331
        %p333 = pneg %p252
        %p334 = pneg %p249
        %s335 = sand.u32 %s239, 1
        %s336 = scalar_lea.sflag [#allocation8], %s335
        %s337 = sand.u32 %s239, 1
        %s338 = scalar_lea.vmem [#allocation7], %s337
        %p339 = scmp.lt.s32.totalorder %s33, 1
        %s340 = scalar_select %p339, %s33, 1
        %s341 = smul.addr %s340, 54
        %s342 = smul.addr %s341, 4
        %s343 = scalar_lea.vmem %s0, %s342
        %s344 = smul.u32 8, %s34
        %s346 = smul.u32 %s34, 8
        %s347 = smul.u32 %s346, 3
        %s348 = smul.addr %s347, 4
        %s349 = scalar_lea.vmem %s343, %s348
        %v350 = vld [vmem:[%s349] sm:$0xf]
        %v351 = vld [vmem:[%s349 + $0x4] sm:$0xf]
        %v352 = vld [vmem:[%s349 + $0x8] sm:$0x1]
        %v353 = vld [vmem:[%s349 + $0xc] sm:$0xf]
        %v354 = vld [vmem:[%s349 + $0x10] sm:$0xf]
        %v355 = vld [vmem:[%s349 + $0x14] sm:$0x1]
        %v356 = vld [vmem:[%s349 + $0x18] sm:$0xf]
        %v357 = vld [vmem:[%s349 + $0x1c] sm:$0xf]
        %v358 = vld [vmem:[%s349 + $0x20] sm:$0x1]
        %v359 = vld [vmem:[%s349 + $0x24] sm:$0xf]
        %v360 = vld [vmem:[%s349 + $0x28] sm:$0xf]
        %v361 = vld [vmem:[%s349 + $0x2c] sm:$0x1]
        %v362 = vld [vmem:[%s349 + $0x30] sm:$0xf]
        %v363 = vld [vmem:[%s349 + $0x34] sm:$0xf]
        %v364 = vld [vmem:[%s349 + $0x38] sm:$0x1]
        %v365 = vld [vmem:[%s349 + $0x3c] sm:$0xf]
        %v366 = vld [vmem:[%s349 + $0x40] sm:$0xf]
        %v367 = vld [vmem:[%s349 + $0x44] sm:$0x1]
        %v368 = vld [vmem:[%s349 + $0x48] sm:$0xf]
        %v369 = vld [vmem:[%s349 + $0x4c] sm:$0xf]
        %v370 = vld [vmem:[%s349 + $0x50] sm:$0x1]
        %v371 = vld [vmem:[%s349 + $0x54] sm:$0xf]
        %v372 = vld [vmem:[%s349 + $0x58] sm:$0xf]
        %v373 = vld [vmem:[%s349 + $0x5c] sm:$0x1]
        %v374 = vld [vmem:[%s349 + $0x60] sm:$0xf]
        %v375 = vld [vmem:[%s349 + $0x64] sm:$0xf]
        %v376 = vld [vmem:[%s349 + $0x68] sm:$0x1]
        %v377 = vld [vmem:[%s349 + $0x6c] sm:$0xf]
        %v378 = vld [vmem:[%s349 + $0x70] sm:$0xf]
        %v379 = vld [vmem:[%s349 + $0x74] sm:$0x1]
        %vm380 = vsmask.f32 3328
        %vm381 = vsmask.f32 7440
        %vm382 = vmor %vm380, %vm381
        %v384 = vshrl.u32 %v350, 16
        %v386 = vrot.slane %v384, 4
        %v387 = vshll.u32 %v350, 16
        %v389 = vrot.slane %v387, 5
        %v390 = vor.u32 %v386, %v389
        %v391 = vrot.slane %v390, 4
        %v393 = vshll.u32 %v351, 16
        %v395 = vrot.slane %v393, 5
        %v396 = vsel %vm382, %v391, %v395
        %v397 = vshrl.u32 %v351, 16
        %v399 = vrot.slane %v397, 4
        %v400 = vor.u32 %v399, %v395
        %v401 = vrot.slane %v400, 4
        %v403 = vshll.u32 %v352, 16
        %v405 = vrot.slane %v403, 5
        %v406 = vsel %vm382, %v401, %v405
        %v408 = vshrl.u32 %v353, 16
        %v410 = vrot.slane %v408, 4
        %v411 = vshll.u32 %v353, 16
        %v413 = vrot.slane %v411, 5
        %v414 = vor.u32 %v410, %v413
        %v415 = vrot.slane %v414, 4
        %v417 = vshll.u32 %v354, 16
        %v419 = vrot.slane %v417, 5
        %v420 = vsel %vm382, %v415, %v419
        %v421 = vshrl.u32 %v354, 16
        %v423 = vrot.slane %v421, 4
        %v424 = vor.u32 %v423, %v419
        %v425 = vrot.slane %v424, 4
        %v427 = vshll.u32 %v355, 16
        %v429 = vrot.slane %v427, 5
        %v430 = vsel %vm382, %v425, %v429
        %v432 = vshrl.u32 %v356, 16
        %v434 = vrot.slane %v432, 4
        %v435 = vshll.u32 %v356, 16
        %v437 = vrot.slane %v435, 5
        %v438 = vor.u32 %v434, %v437
        %v439 = vrot.slane %v438, 4
        %v441 = vshll.u32 %v357, 16
        %v443 = vrot.slane %v441, 5
        %v444 = vsel %vm382, %v439, %v443
        %v445 = vshrl.u32 %v357, 16
        %v447 = vrot.slane %v445, 4
        %v448 = vor.u32 %v447, %v443
        %v449 = vrot.slane %v448, 4
        %v451 = vshll.u32 %v358, 16
        %v453 = vrot.slane %v451, 5
        %v454 = vsel %vm382, %v449, %v453
        %v456 = vshrl.u32 %v359, 16
        %v458 = vrot.slane %v456, 4
        %v459 = vshll.u32 %v359, 16
        %v461 = vrot.slane %v459, 5
        %v462 = vor.u32 %v458, %v461
        %v463 = vrot.slane %v462, 4
        %v465 = vshll.u32 %v360, 16
        %v467 = vrot.slane %v465, 5
        %v468 = vsel %vm382, %v463, %v467
        %v469 = vshrl.u32 %v360, 16
        %v471 = vrot.slane %v469, 4
        %v472 = vor.u32 %v471, %v467
        %v473 = vrot.slane %v472, 4
        %v475 = vshll.u32 %v361, 16
        %v477 = vrot.slane %v475, 5
        %v478 = vsel %vm382, %v473, %v477
        %v480 = vshrl.u32 %v362, 16
        %v482 = vrot.slane %v480, 4
        %v483 = vshll.u32 %v362, 16
        %v485 = vrot.slane %v483, 5
        %v486 = vor.u32 %v482, %v485
        %v487 = vrot.slane %v486, 4
        %v489 = vshll.u32 %v363, 16
        %v491 = vrot.slane %v489, 5
        %v492 = vsel %vm382, %v487, %v491
        %v493 = vshrl.u32 %v363, 16
        %v495 = vrot.slane %v493, 4
        %v496 = vor.u32 %v495, %v491
        %v497 = vrot.slane %v496, 4
        %v499 = vshll.u32 %v364, 16
        %v501 = vrot.slane %v499, 5
        %v502 = vsel %vm382, %v497, %v501
        %v504 = vshrl.u32 %v365, 16
        %v506 = vrot.slane %v504, 4
        %v507 = vshll.u32 %v365, 16
        %v509 = vrot.slane %v507, 5
        %v510 = vor.u32 %v506, %v509
        %v511 = vrot.slane %v510, 4
        %v513 = vshll.u32 %v366, 16
        %v515 = vrot.slane %v513, 5
        %v516 = vsel %vm382, %v511, %v515
        %v517 = vshrl.u32 %v366, 16
        %v519 = vrot.slane %v517, 4
        %v520 = vor.u32 %v519, %v515
        %v521 = vrot.slane %v520, 4
        %v523 = vshll.u32 %v367, 16
        %v525 = vrot.slane %v523, 5
        %v526 = vsel %vm382, %v521, %v525
        %v528 = vshrl.u32 %v368, 16
        %v530 = vrot.slane %v528, 4
        %v531 = vshll.u32 %v368, 16
        %v533 = vrot.slane %v531, 5
        %v534 = vor.u32 %v530, %v533
        %v535 = vrot.slane %v534, 4
        %v537 = vshll.u32 %v369, 16
        %v539 = vrot.slane %v537, 5
        %v540 = vsel %vm382, %v535, %v539
        %v541 = vshrl.u32 %v369, 16
        %v543 = vrot.slane %v541, 4
        %v544 = vor.u32 %v543, %v539
        %v545 = vrot.slane %v544, 4
        %v547 = vshll.u32 %v370, 16
        %v549 = vrot.slane %v547, 5
        %v550 = vsel %vm382, %v545, %v549
        %v552 = vshrl.u32 %v371, 16
        %v554 = vrot.slane %v552, 4
        %v555 = vshll.u32 %v371, 16
        %v557 = vrot.slane %v555, 5
        %v558 = vor.u32 %v554, %v557
        %v559 = vrot.slane %v558, 4
        %v561 = vshll.u32 %v372, 16
        %v563 = vrot.slane %v561, 5
        %v564 = vsel %vm382, %v559, %v563
        %v565 = vshrl.u32 %v372, 16
        %v567 = vrot.slane %v565, 4
        %v568 = vor.u32 %v567, %v563
        %v569 = vrot.slane %v568, 4
        %v571 = vshll.u32 %v373, 16
        %v573 = vrot.slane %v571, 5
        %v574 = vsel %vm382, %v569, %v573
        %vm599 = vcmask 1042432
        %vm600 = vcmask 1046532
        %vm601 = vmor %vm599, %vm600
        %v602 = vrot.slane %v350, 5
        %v603 = vrot.slane %v602, 4
        %v604 = vrot.slane %v351, 5
        %v605 = vsel %vm601, %v603, %v604
        %v606 = vrot.slane %v604, 4
        %v607 = vrot.slane %v352, 5
        %v608 = vsel %vm601, %v606, %v607
        %v609 = vrot.slane %v353, 5
        %v610 = vrot.slane %v609, 4
        %v611 = vrot.slane %v354, 5
        %v612 = vsel %vm601, %v610, %v611
        %v613 = vrot.slane %v611, 4
        %v614 = vrot.slane %v355, 5
        %v615 = vsel %vm601, %v613, %v614
        %v616 = vrot.slane %v356, 5
        %v617 = vrot.slane %v616, 4
        %v618 = vrot.slane %v357, 5
        %v619 = vsel %vm601, %v617, %v618
        %v620 = vrot.slane %v618, 4
        %v621 = vrot.slane %v358, 5
        %v622 = vsel %vm601, %v620, %v621
        %v623 = vrot.slane %v359, 5
        %v624 = vrot.slane %v623, 4
        %v625 = vrot.slane %v360, 5
        %v626 = vsel %vm601, %v624, %v625
        %v627 = vrot.slane %v625, 4
        %v628 = vrot.slane %v361, 5
        %v629 = vsel %vm601, %v627, %v628
        %v630 = vrot.slane %v362, 5
        %v631 = vrot.slane %v630, 4
        %v632 = vrot.slane %v363, 5
        %v633 = vsel %vm601, %v631, %v632
        %v634 = vrot.slane %v632, 4
        %v635 = vrot.slane %v364, 5
        %v636 = vsel %vm601, %v634, %v635
        %v637 = vrot.slane %v365, 5
        %v638 = vrot.slane %v637, 4
        %v639 = vrot.slane %v366, 5
        %v640 = vsel %vm601, %v638, %v639
        %v641 = vrot.slane %v639, 4
        %v642 = vrot.slane %v367, 5
        %v643 = vsel %vm601, %v641, %v642
        %v644 = vrot.slane %v368, 5
        %v645 = vrot.slane %v644, 4
        %v646 = vrot.slane %v369, 5
        %v647 = vsel %vm601, %v645, %v646
        %v648 = vrot.slane %v646, 4
        %v649 = vrot.slane %v370, 5
        %v650 = vsel %vm601, %v648, %v649
        %v651 = vrot.slane %v371, 5
        %v652 = vrot.slane %v651, 4
        %v653 = vrot.slane %v372, 5
        %v654 = vsel %vm601, %v652, %v653
        %v655 = vrot.slane %v653, 4
        %v656 = vrot.slane %v373, 5
        %v657 = vsel %vm601, %v655, %v656
        %v659 = vshrl.u32 %v374, 16
        %v661 = vrot.slane %v659, 4
        %v662 = vshll.u32 %v374, 16
        %v664 = vrot.slane %v662, 5
        %v665 = vor.u32 %v661, %v664
        %v666 = vrot.slane %v665, 4
        %v668 = vshll.u32 %v375, 16
        %v670 = vrot.slane %v668, 5
        %v671 = vsel %vm382, %v666, %v670
        %v672 = vshrl.u32 %v375, 16
        %v674 = vrot.slane %v672, 4
        %v675 = vor.u32 %v674, %v670
        %v676 = vrot.slane %v675, 4
        %v678 = vshll.u32 %v376, 16
        %v680 = vrot.slane %v678, 5
        %v681 = vsel %vm382, %v676, %v680
        %v685 = vrot.slane %v374, 5
        %v686 = vrot.slane %v685, 4
        %v687 = vrot.slane %v375, 5
        %v688 = vsel %vm601, %v686, %v687
        %v689 = vrot.slane %v687, 4
        %v690 = vrot.slane %v376, 5
        %v691 = vsel %vm601, %v689, %v690
        %v693 = vshrl.u32 %v377, 16
        %v695 = vrot.slane %v693, 4
        %v696 = vshll.u32 %v377, 16
        %v698 = vrot.slane %v696, 5
        %v699 = vor.u32 %v695, %v698
        %v700 = vrot.slane %v699, 4
        %v702 = vshll.u32 %v378, 16
        %v704 = vrot.slane %v702, 5
        %v705 = vsel %vm382, %v700, %v704
        %v706 = vshrl.u32 %v378, 16
        %v708 = vrot.slane %v706, 4
        %v709 = vor.u32 %v708, %v704
        %v710 = vrot.slane %v709, 4
        %v712 = vshll.u32 %v379, 16
        %v714 = vrot.slane %v712, 5
        %v715 = vsel %vm382, %v710, %v714
        %v719 = vrot.slane %v377, 5
        %v720 = vrot.slane %v719, 4
        %v721 = vrot.slane %v378, 5
        %v722 = vsel %vm601, %v720, %v721
        %v723 = vrot.slane %v721, 4
        %v724 = vrot.slane %v379, 5
        %v725 = vsel %vm601, %v723, %v724
        %v726 = vunpack.c.l.b16 %v350
        %v727 = vunpack.c.l.b16 %v351
        %v728 = vunpack.c.l.b16 %v353
        %v729 = vunpack.c.l.b16 %v354
        %v730 = vunpack.c.l.b16 %v356
        %v731 = vunpack.c.l.b16 %v357
        %v732 = vunpack.c.l.b16 %v359
        %v733 = vunpack.c.l.b16 %v360
        %v734 = vunpack.c.l.b16 %v362
        %v735 = vunpack.c.l.b16 %v363
        %v736 = vunpack.c.l.b16 %v365
        %v737 = vunpack.c.l.b16 %v366
        %v738 = vunpack.c.l.b16 %v368
        %v739 = vunpack.c.l.b16 %v369
        %v740 = vunpack.c.l.b16 %v371
        %v741 = vunpack.c.l.b16 %v372
        %v742 = vpack.c.b16 %v727, %v726
        %v743 = vpack.c.b16 %v729, %v728
        %v744 = vpack.c.b16 %v731, %v730
        %v745 = vpack.c.b16 %v733, %v732
        %v746 = vpack.c.b16 %v735, %v734
        %v747 = vpack.c.b16 %v737, %v736
        %v748 = vpack.c.b16 %v739, %v738
        %v749 = vpack.c.b16 %v741, %v740
        %v750 = vunpack.c.l.b16 %v396
        %v751 = vunpack.c.l.b16 %v406
        %v752 = vunpack.c.l.b16 %v420
        %v753 = vunpack.c.l.b16 %v430
        %v754 = vunpack.c.l.b16 %v444
        %v755 = vunpack.c.l.b16 %v454
        %v756 = vunpack.c.l.b16 %v468
        %v757 = vunpack.c.l.b16 %v478
        %v758 = vunpack.c.l.b16 %v492
        %v759 = vunpack.c.l.b16 %v502
        %v760 = vunpack.c.l.b16 %v516
        %v761 = vunpack.c.l.b16 %v526
        %v762 = vunpack.c.l.b16 %v540
        %v763 = vunpack.c.l.b16 %v550
        %v764 = vunpack.c.l.b16 %v564
        %v765 = vunpack.c.l.b16 %v574
        %v766 = vpack.c.b16 %v751, %v750
        %v767 = vpack.c.b16 %v753, %v752
        %v768 = vpack.c.b16 %v755, %v754
        %v769 = vpack.c.b16 %v757, %v756
        %v770 = vpack.c.b16 %v759, %v758
        %v771 = vpack.c.b16 %v761, %v760
        %v772 = vpack.c.b16 %v763, %v762
        %v773 = vpack.c.b16 %v765, %v764
        %774 = vrot.lane.b32.xlu0 %v766, 3
        %v775 = vpop.permute.xlu0 %774
        %776 = vrot.lane.b32.xlu0 %v767, 3
        %v777 = vpop.permute.xlu0 %776
        %778 = vrot.lane.b32.xlu0 %v768, 3
        %v779 = vpop.permute.xlu0 %778
        %780 = vrot.lane.b32.xlu0 %v769, 3
        %v781 = vpop.permute.xlu0 %780
        %782 = vrot.lane.b32.xlu0 %v770, 3
        %v783 = vpop.permute.xlu0 %782
        %784 = vrot.lane.b32.xlu0 %v771, 3
        %v785 = vpop.permute.xlu0 %784
        %786 = vrot.lane.b32.xlu0 %v772, 3
        %v787 = vpop.permute.xlu0 %786
        %788 = vrot.lane.b32.xlu0 %v773, 3
        %v789 = vpop.permute.xlu0 %788
        %v790 = vunpack.c.l.b16 %v605
        %v791 = vunpack.c.l.b16 %v608
        %v792 = vunpack.c.l.b16 %v612
        %v793 = vunpack.c.l.b16 %v615
        %v794 = vunpack.c.l.b16 %v619
        %v795 = vunpack.c.l.b16 %v622
        %v796 = vunpack.c.l.b16 %v626
        %v797 = vunpack.c.l.b16 %v629
        %v798 = vunpack.c.l.b16 %v633
        %v799 = vunpack.c.l.b16 %v636
        %v800 = vunpack.c.l.b16 %v640
        %v801 = vunpack.c.l.b16 %v643
        %v802 = vunpack.c.l.b16 %v647
        %v803 = vunpack.c.l.b16 %v650
        %v804 = vunpack.c.l.b16 %v654
        %v805 = vunpack.c.l.b16 %v657
        %v806 = vpack.c.b16 %v791, %v790
        %v807 = vpack.c.b16 %v793, %v792
        %v808 = vpack.c.b16 %v795, %v794
        %v809 = vpack.c.b16 %v797, %v796
        %v810 = vpack.c.b16 %v799, %v798
        %v811 = vpack.c.b16 %v801, %v800
        %v812 = vpack.c.b16 %v803, %v802
        %v813 = vpack.c.b16 %v805, %v804
        %814 = vrot.lane.b32.xlu0 %v806, 6
        %v815 = vpop.permute.xlu0 %814
        %816 = vrot.lane.b32.xlu0 %v807, 6
        %v817 = vpop.permute.xlu0 %816
        %818 = vrot.lane.b32.xlu0 %v808, 6
        %v819 = vpop.permute.xlu0 %818
        %820 = vrot.lane.b32.xlu0 %v809, 6
        %v821 = vpop.permute.xlu0 %820
        %822 = vrot.lane.b32.xlu0 %v810, 6
        %v823 = vpop.permute.xlu0 %822
        %824 = vrot.lane.b32.xlu0 %v811, 6
        %v825 = vpop.permute.xlu0 %824
        %826 = vrot.lane.b32.xlu0 %v812, 6
        %v827 = vpop.permute.xlu0 %826
        %828 = vrot.lane.b32.xlu0 %v813, 6
        %v829 = vpop.permute.xlu0 %828
        %v830 = vunpack.c.l.b16 %v374
        %v831 = vunpack.c.l.b16 %v375
        %v832 = vpack.c.b16 %v831, %v830
        %833 = vrot.lane.b32.xlu0 %v743, 9
        %v834 = vpop.permute.xlu0 %833
        %835 = vrot.lane.b32.xlu0 %v744, 9
        %v836 = vpop.permute.xlu0 %835
        %837 = vrot.lane.b32.xlu0 %v745, 9
        %v838 = vpop.permute.xlu0 %837
        %839 = vrot.lane.b32.xlu0 %v746, 9
        %v840 = vpop.permute.xlu0 %839
        %841 = vrot.lane.b32.xlu0 %v747, 9
        %v842 = vpop.permute.xlu0 %841
        %843 = vrot.lane.b32.xlu0 %v748, 9
        %v844 = vpop.permute.xlu0 %843
        %845 = vrot.lane.b32.xlu0 %v749, 9
        %v846 = vpop.permute.xlu0 %845
        %847 = vrot.lane.b32.xlu0 %v832, 9
        %v848 = vpop.permute.xlu0 %847
        %v849 = vunpack.c.l.b16 %v671
        %v850 = vunpack.c.l.b16 %v681
        %v851 = vpack.c.b16 %v850, %v849
        %852 = vrot.lane.b32.xlu0 %v767, 12
        %v853 = vpop.permute.xlu0 %852
        %854 = vrot.lane.b32.xlu0 %v768, 12
        %v855 = vpop.permute.xlu0 %854
        %856 = vrot.lane.b32.xlu0 %v769, 12
        %v857 = vpop.permute.xlu0 %856
        %858 = vrot.lane.b32.xlu0 %v770, 12
        %v859 = vpop.permute.xlu0 %858
        %860 = vrot.lane.b32.xlu0 %v771, 12
        %v861 = vpop.permute.xlu0 %860
        %862 = vrot.lane.b32.xlu0 %v772, 12
        %v863 = vpop.permute.xlu0 %862
        %864 = vrot.lane.b32.xlu0 %v773, 12
        %v865 = vpop.permute.xlu0 %864
        %866 = vrot.lane.b32.xlu0 %v851, 12
        %v867 = vpop.permute.xlu0 %866
        %v868 = vunpack.c.l.b16 %v688
        %v869 = vunpack.c.l.b16 %v691
        %v870 = vpack.c.b16 %v869, %v868
        %871 = vrot.lane.b32.xlu0 %v807, 15
        %v872 = vpop.permute.xlu0 %871
        %873 = vrot.lane.b32.xlu0 %v808, 15
        %v874 = vpop.permute.xlu0 %873
        %875 = vrot.lane.b32.xlu0 %v809, 15
        %v876 = vpop.permute.xlu0 %875
        %877 = vrot.lane.b32.xlu0 %v810, 15
        %v878 = vpop.permute.xlu0 %877
        %879 = vrot.lane.b32.xlu0 %v811, 15
        %v880 = vpop.permute.xlu0 %879
        %881 = vrot.lane.b32.xlu0 %v812, 15
        %v882 = vpop.permute.xlu0 %881
        %883 = vrot.lane.b32.xlu0 %v813, 15
        %v884 = vpop.permute.xlu0 %883
        %885 = vrot.lane.b32.xlu0 %v870, 15
        %v886 = vpop.permute.xlu0 %885
        %v887 = vunpack.c.l.b16 %v377
        %v888 = vunpack.c.l.b16 %v378
        %v889 = vpack.c.b16 %v888, %v887
        %890 = vrot.lane.b32.xlu0 %v744, 18
        %v891 = vpop.permute.xlu0 %890
        %892 = vrot.lane.b32.xlu0 %v745, 18
        %v893 = vpop.permute.xlu0 %892
        %894 = vrot.lane.b32.xlu0 %v746, 18
        %v895 = vpop.permute.xlu0 %894
        %896 = vrot.lane.b32.xlu0 %v747, 18
        %v897 = vpop.permute.xlu0 %896
        %898 = vrot.lane.b32.xlu0 %v748, 18
        %v899 = vpop.permute.xlu0 %898
        %900 = vrot.lane.b32.xlu0 %v749, 18
        %v901 = vpop.permute.xlu0 %900
        %902 = vrot.lane.b32.xlu0 %v832, 18
        %v903 = vpop.permute.xlu0 %902
        %904 = vrot.lane.b32.xlu0 %v889, 18
        %v905 = vpop.permute.xlu0 %904
        %v906 = vunpack.c.l.b16 %v705
        %v907 = vunpack.c.l.b16 %v715
        %v908 = vpack.c.b16 %v907, %v906
        %909 = vrot.lane.b32.xlu0 %v768, 21
        %v910 = vpop.permute.xlu0 %909
        %911 = vrot.lane.b32.xlu0 %v769, 21
        %v912 = vpop.permute.xlu0 %911
        %913 = vrot.lane.b32.xlu0 %v770, 21
        %v914 = vpop.permute.xlu0 %913
        %915 = vrot.lane.b32.xlu0 %v771, 21
        %v916 = vpop.permute.xlu0 %915
        %917 = vrot.lane.b32.xlu0 %v772, 21
        %v918 = vpop.permute.xlu0 %917
        %919 = vrot.lane.b32.xlu0 %v773, 21
        %v920 = vpop.permute.xlu0 %919
        %921 = vrot.lane.b32.xlu0 %v851, 21
        %v922 = vpop.permute.xlu0 %921
        %923 = vrot.lane.b32.xlu0 %v908, 21
        %v924 = vpop.permute.xlu0 %923
        %v925 = vunpack.c.l.b16 %v722
        %v926 = vunpack.c.l.b16 %v725
        %v927 = vpack.c.b16 %v926, %v925
        %928 = vrot.lane.b32.xlu0 %v808, 24
        %v929 = vpop.permute.xlu0 %928
        %930 = vrot.lane.b32.xlu0 %v809, 24
        %v931 = vpop.permute.xlu0 %930
        %932 = vrot.lane.b32.xlu0 %v810, 24
        %v933 = vpop.permute.xlu0 %932
        %934 = vrot.lane.b32.xlu0 %v811, 24
        %v935 = vpop.permute.xlu0 %934
        %936 = vrot.lane.b32.xlu0 %v812, 24
        %v937 = vpop.permute.xlu0 %936
        %938 = vrot.lane.b32.xlu0 %v813, 24
        %v939 = vpop.permute.xlu0 %938
        %940 = vrot.lane.b32.xlu0 %v870, 24
        %v941 = vpop.permute.xlu0 %940
        %942 = vrot.lane.b32.xlu0 %v927, 24
        %v943 = vpop.permute.xlu0 %942
        %vm944 = vcmask 23552
        %v947 = vsel %vm944, %v742, %v775
        %v950 = vsel %vm944, %v743, %v777
        %v953 = vsel %vm944, %v744, %v779
        %v956 = vsel %vm944, %v745, %v781
        %v959 = vsel %vm944, %v746, %v783
        %v962 = vsel %vm944, %v747, %v785
        %v965 = vsel %vm944, %v748, %v787
        %v968 = vsel %vm944, %v749, %v789
        %vm969 = vcmask 48128
        %v971 = vsel %vm969, %v947, %v815
        %v973 = vsel %vm969, %v950, %v817
        %v975 = vsel %vm969, %v953, %v819
        %v977 = vsel %vm969, %v956, %v821
        %v979 = vsel %vm969, %v959, %v823
        %v981 = vsel %vm969, %v962, %v825
        %v983 = vsel %vm969, %v965, %v827
        %v985 = vsel %vm969, %v968, %v829
        %vm986 = vcmask 72704
        %v988 = vsel %vm986, %v971, %v834
        %v990 = vsel %vm986, %v973, %v836
        %v992 = vsel %vm986, %v975, %v838
        %v994 = vsel %vm986, %v977, %v840
        %v996 = vsel %vm986, %v979, %v842
        %v998 = vsel %vm986, %v981, %v844
        %v1000 = vsel %vm986, %v983, %v846
        %v1002 = vsel %vm986, %v985, %v848
        %vm1003 = vcmask 97280
        %v1005 = vsel %vm1003, %v988, %v853
        %v1007 = vsel %vm1003, %v990, %v855
        %v1009 = vsel %vm1003, %v992, %v857
        %v1011 = vsel %vm1003, %v994, %v859
        %v1013 = vsel %vm1003, %v996, %v861
        %v1015 = vsel %vm1003, %v998, %v863
        %v1017 = vsel %vm1003, %v1000, %v865
        %v1019 = vsel %vm1003, %v1002, %v867
        %vm1020 = vcmask 121856
        %v1022 = vsel %vm1020, %v1005, %v872
        %v1024 = vsel %vm1020, %v1007, %v874
        %v1026 = vsel %vm1020, %v1009, %v876
        %v1028 = vsel %vm1020, %v1011, %v878
        %v1030 = vsel %vm1020, %v1013, %v880
        %v1032 = vsel %vm1020, %v1015, %v882
        %v1034 = vsel %vm1020, %v1017, %v884
        %v1036 = vsel %vm1020, %v1019, %v886
        %vm1037 = vcmask 146432
        %v1039 = vsel %vm1037, %v1022, %v891
        %v1041 = vsel %vm1037, %v1024, %v893
        %v1043 = vsel %vm1037, %v1026, %v895
        %v1045 = vsel %vm1037, %v1028, %v897
        %v1047 = vsel %vm1037, %v1030, %v899
        %v1049 = vsel %vm1037, %v1032, %v901
        %v1051 = vsel %vm1037, %v1034, %v903
        %v1053 = vsel %vm1037, %v1036, %v905
        %vm1054 = vcmask 171008
        %v1056 = vsel %vm1054, %v1039, %v910
        %v1058 = vsel %vm1054, %v1041, %v912
        %v1060 = vsel %vm1054, %v1043, %v914
        %v1062 = vsel %vm1054, %v1045, %v916
        %v1064 = vsel %vm1054, %v1047, %v918
        %v1066 = vsel %vm1054, %v1049, %v920
        %v1068 = vsel %vm1054, %v1051, %v922
        %v1070 = vsel %vm1054, %v1053, %v924
        %vm1071 = vcmask 195584
        %v1073 = vsel %vm1071, %v1056, %v929
        %v1075 = vsel %vm1071, %v1058, %v931
        %v1077 = vsel %vm1071, %v1060, %v933
        %v1079 = vsel %vm1071, %v1062, %v935
        %v1081 = vsel %vm1071, %v1064, %v937
        %v1083 = vsel %vm1071, %v1066, %v939
        %v1085 = vsel %vm1071, %v1068, %v941
        %v1087 = vsel %vm1071, %v1070, %v943
        %v1088 = vld [vmem:[%s1] sm:$0xf]
        %v1089 = vld [vmem:[%s1 + $0x4] sm:$0xf]
        %v1090 = vld [vmem:[%s1 + $0x8] sm:$0xf]
        %v1091 = vld [vmem:[%s1 + $0xc] sm:$0x3]
        %v1092 = vld [vmem:[%s2] sm:$0x1]
        %v1094 = vperm.slane %v1092, 0
        %v1100 = vunpack.c.l.b16 %v1088
        %v1101 = vunpack.c.l.b16 %v1089
        %v1102 = vunpack.c.l.b16 %v1090
        %v1103 = vunpack.c.l.b16 %v1091
        %v1104 = vpack.c.b16 %v1101, %v1100
        %v1105 = vpack.c.b16 %v1103, %v1102
        %vm1107 = vcmask 220160
        %v1108 = vsel %vm1107, %v1073, 0
        %v1110 = vsel %vm1107, %v1075, 0
        %v1112 = vsel %vm1107, %v1077, 0
        %v1114 = vsel %vm1107, %v1079, 0
        %v1116 = vsel %vm1107, %v1081, 0
        %v1118 = vsel %vm1107, %v1083, 0
        %v1120 = vsel %vm1107, %v1085, 0
        %v1122 = vsel %vm1107, %v1087, 0
        %vm1124 = vcmask 1044480
        %vm1125 = vcmask 1045504
        %v1126 = vsel %vm1124, 4294967295, 65535
        %v1127 = vsel %vm1125, %v1126, 0
        %v1129 = vand.u32 %v1105, %v1127
        %1131 = vmatpush.bf16.msra.mxu0 0
        %1132 = vmatpush.bf16.msra.mxu0 0
        %1133 = vmatpush.bf16.msra.mxu0 0
        %1134 = vmatpush.bf16.msra.mxu0 0
        %1135 = vmatpush.bf16.msra.mxu0 0
        %1136 = vmatpush.bf16.msra.mxu0 0
        %1137 = vmatpush.bf16.msra.mxu0 %v1129
        %1138 = vmatpush.bf16.msra.mxu0 %v1104
        %1139 = vmatmul.bf16.gmra.mxu0 %v1108
        %v1140 = vpop.f32.mrf.mxu0
        %v1141 = vadd.f32 %v1094, %v1140
        %v1142 = vpop.f32.mrf.mxu0
        %v1143 = vadd.f32 %v1094, %v1142
        %1144 = vmatmul.bf16.gmra.mxu0 %v1110
        %v1145 = vpop.f32.mrf.mxu0
        %v1146 = vadd.f32 %v1094, %v1145
        %v1147 = vpop.f32.mrf.mxu0
        %v1148 = vadd.f32 %v1094, %v1147
        %1149 = vmatmul.bf16.gmra.mxu0 %v1112
        %v1150 = vpop.f32.mrf.mxu0
        %v1151 = vadd.f32 %v1094, %v1150
        %v1152 = vpop.f32.mrf.mxu0
        %v1153 = vadd.f32 %v1094, %v1152
        %1154 = vmatmul.bf16.gmra.mxu0 %v1114
        %v1155 = vpop.f32.mrf.mxu0
        %v1156 = vadd.f32 %v1094, %v1155
        %v1157 = vpop.f32.mrf.mxu0
        %v1158 = vadd.f32 %v1094, %v1157
        %1159 = vmatmul.bf16.gmra.mxu0 %v1116
        %v1160 = vpop.f32.mrf.mxu0
        %v1161 = vadd.f32 %v1094, %v1160
        %v1162 = vpop.f32.mrf.mxu0
        %v1163 = vadd.f32 %v1094, %v1162
        %1164 = vmatmul.bf16.gmra.mxu0 %v1118
        %v1165 = vpop.f32.mrf.mxu0
        %v1166 = vadd.f32 %v1094, %v1165
        %v1167 = vpop.f32.mrf.mxu0
        %v1168 = vadd.f32 %v1094, %v1167
        %1169 = vmatmul.bf16.gmra.mxu0 %v1120
        %v1170 = vpop.f32.mrf.mxu0
        %v1171 = vadd.f32 %v1094, %v1170
        %v1172 = vpop.f32.mrf.mxu0
        %v1173 = vadd.f32 %v1094, %v1172
        %1174 = vmatmul.bf16.gmra.mxu0 %v1122
        %v1175 = vpop.f32.mrf.mxu0
        %v1176 = vadd.f32 %v1094, %v1175
        %v1177 = vpop.f32.mrf.mxu0
        %v1178 = vadd.f32 %v1094, %v1177
        %1179 = vdwg.mxu0
        %v1180 = vmax.f32 %v1141, 0.0
        %v1181 = vmax.f32 %v1143, 0.0
        %v1182 = vmax.f32 %v1146, 0.0
        %v1183 = vmax.f32 %v1148, 0.0
        %v1184 = vmax.f32 %v1151, 0.0
        %v1185 = vmax.f32 %v1153, 0.0
        %v1186 = vmax.f32 %v1156, 0.0
        %v1187 = vmax.f32 %v1158, 0.0
        %v1188 = vmax.f32 %v1161, 0.0
        %v1189 = vmax.f32 %v1163, 0.0
        %v1190 = vmax.f32 %v1166, 0.0
        %v1191 = vmax.f32 %v1168, 0.0
        %v1192 = vmax.f32 %v1171, 0.0
        %v1193 = vmax.f32 %v1173, 0.0
        %v1194 = vmax.f32 %v1176, 0.0
        %v1195 = vmax.f32 %v1178, 0.0
        %v1196 = vpack.c.bf16 %v1180, %v1180
        %v1197 = vpack.c.bf16 %v1181, %v1181
        %v1198 = vpack.c.bf16 %v1182, %v1182
        %v1199 = vpack.c.bf16 %v1183, %v1183
        %v1200 = vpack.c.bf16 %v1184, %v1184
        %v1201 = vpack.c.bf16 %v1185, %v1185
        %v1202 = vpack.c.bf16 %v1186, %v1186
        %v1203 = vpack.c.bf16 %v1187, %v1187
        %v1204 = vpack.c.bf16 %v1188, %v1188
        %v1205 = vpack.c.bf16 %v1189, %v1189
        %v1206 = vpack.c.bf16 %v1190, %v1190
        %v1207 = vpack.c.bf16 %v1191, %v1191
        %v1208 = vpack.c.bf16 %v1192, %v1192
        %v1209 = vpack.c.bf16 %v1193, %v1193
        %v1210 = vpack.c.bf16 %v1194, %v1194
        %v1211 = vpack.c.bf16 %v1195, %v1195
        %1212 = vst [vmem:[%s319] sm:$0xf] %v1196
        %1213 = vst [vmem:[%s319 + $0x4] sm:$0xf] %v1197
        %1214 = vst [vmem:[%s319 + $0x8] sm:$0xf] %v1198
        %1215 = vst [vmem:[%s319 + $0xc] sm:$0xf] %v1199
        %1216 = vst [vmem:[%s319 + $0x10] sm:$0xf] %v1200
        %1217 = vst [vmem:[%s319 + $0x14] sm:$0xf] %v1201
        %1218 = vst [vmem:[%s319 + $0x18] sm:$0xf] %v1202
        %1219 = vst [vmem:[%s319 + $0x1c] sm:$0xf] %v1203
        %1220 = vst [vmem:[%s319 + $0x20] sm:$0xf] %v1204
        %1221 = vst [vmem:[%s319 + $0x24] sm:$0xf] %v1205
        %1222 = vst [vmem:[%s319 + $0x28] sm:$0xf] %v1206
        %1223 = vst [vmem:[%s319 + $0x2c] sm:$0xf] %v1207
        %1224 = vst [vmem:[%s319 + $0x30] sm:$0xf] %v1208
        %1225 = vst [vmem:[%s319 + $0x34] sm:$0xf] %v1209
        %1226 = vst [vmem:[%s319 + $0x38] sm:$0xf] %v1210
        %1227 = vst [vmem:[%s319 + $0x3c] sm:$0xf] %v1211
        %p1228 = scmp.eq.s32.totalorder %s34, 0
        // Predicated region
        $region41: #{tpu_custom_call.1} parent=39 // pred_check
          %p1229 = pneg %p1228
        $region42: #{tpu_custom_call.1} parent=39 // pred_check_branch
          %1231 = sbr.rel (%p1229) target = $region44
        $region43: #{tpu_custom_call.1} parent=39 // pred_region
          %1232 = vst [vmem:[%s325] sm:$0x1] 0.0
        $region44: #{tpu_custom_call.1} parent=39 // pred_fallthru
          _
        %v1233 = vld [vmem:[%s325] sm:$0x1]
        %v1234 = vadd.f32 %v1180, %v1181
        %v1235 = vadd.f32 %v1234, %v1182
        %v1236 = vadd.f32 %v1235, %v1183
        %v1237 = vadd.f32 %v1236, %v1184
        %v1238 = vadd.f32 %v1237, %v1185
        %v1239 = vadd.f32 %v1238, %v1186
        %v1240 = vadd.f32 %v1239, %v1187
        %v1241 = vadd.f32 %v1240, %v1188
        %v1242 = vadd.f32 %v1241, %v1189
        %v1243 = vadd.f32 %v1242, %v1190
        %v1244 = vadd.f32 %v1243, %v1191
        %v1245 = vadd.f32 %v1244, %v1192
        %v1246 = vadd.f32 %v1245, %v1193
        %v1247 = vadd.f32 %v1246, %v1194
        %v1248 = vadd.f32 %v1247, %v1195
        %v1249 = vrot.slane %v1248, 4
        %v1250 = vadd.f32 %v1248, %v1249
        %v1251 = vrot.slane %v1250, 2
        %v1252 = vadd.f32 %v1250, %v1251
        %v1253 = vrot.slane %v1252, 1
        %v1254 = vadd.f32 %v1252, %v1253
        %v1255 = vadd.f32 %v1233, %v1254
        %1256 = vst [vmem:[%s325] sm:$0x1] %v1255
        %p1257 = scmp.eq.s32.totalorder %s34, 1
        // Predicated region
        $region45: #{tpu_custom_call.1} parent=39 // pred_check
          %p1258 = pneg %p1257
        $region46: #{tpu_custom_call.1} parent=39 // pred_check_branch
          %1260 = sbr.rel (%p1258) target = $region48
        $region47: #{tpu_custom_call.1} parent=39 // pred_region
          %v1261 = vld [vmem:[%s325] sm:$0x1]
          %v1262 = vmul.f32 %v1261, 0.00390625
          %1263 = vst [vmem:[%s325] sm:$0x1] %v1262
          %v1264 = vpack.c.bf16 %v1262, %v1262
          %v1265 = vld [vmem:[%s3] sm:$0xff]
          %v1266 = vld [vmem:[%s3 + $0x8] sm:$0xf]
          %v1267 = vld [vmem:[%s3 + $0xc] sm:$0xff]
          %v1268 = vld [vmem:[%s3 + $0x14] sm:$0xf]
          %v1269 = vld [vmem:[%s3 + $0x18] sm:$0xff]
          %v1270 = vld [vmem:[%s3 + $0x20] sm:$0xf]
          %v1271 = vld [vmem:[%s3 + $0x24] sm:$0xff]
          %v1272 = vld [vmem:[%s3 + $0x2c] sm:$0xf]
          %v1273 = vld [vmem:[%s3 + $0x30] sm:$0xff]
          %v1274 = vld [vmem:[%s3 + $0x38] sm:$0xf]
          %v1275 = vld [vmem:[%s3 + $0x3c] sm:$0xff]
          %v1276 = vld [vmem:[%s3 + $0x44] sm:$0xf]
          %v1277 = vld [vmem:[%s3 + $0x48] sm:$0xff]
          %v1278 = vld [vmem:[%s3 + $0x50] sm:$0xf]
          %v1279 = vld [vmem:[%s3 + $0x54] sm:$0xff]
          %v1280 = vld [vmem:[%s3 + $0x5c] sm:$0xf]
          %v1281 = vld [vmem:[%s3 + $0x60] sm:$0xff]
          %v1282 = vld [vmem:[%s3 + $0x68] sm:$0xf]
          %v1283 = vld [vmem:[%s3 + $0x6c] sm:$0xff]
          %v1284 = vld [vmem:[%s3 + $0x74] sm:$0xf]
          %v1285 = vld [vmem:[%s3 + $0x78] sm:$0xff]
          %v1286 = vld [vmem:[%s3 + $0x80] sm:$0xf]
          %v1287 = vld [vmem:[%s3 + $0x84] sm:$0xff]
          %v1288 = vld [vmem:[%s3 + $0x8c] sm:$0xf]
          %v1289 = vld [vmem:[%s3 + $0x90] sm:$0xff]
          %v1290 = vld [vmem:[%s3 + $0x98] sm:$0xf]
          %v1291 = vld [vmem:[%s3 + $0x9c] sm:$0xff]
          %v1292 = vld [vmem:[%s3 + $0xa4] sm:$0xf]
          %v1293 = vld [vmem:[%s3 + $0xa8] sm:$0xff]
          %v1294 = vld [vmem:[%s3 + $0xb0] sm:$0xf]
          %v1295 = vld [vmem:[%s3 + $0xb4] sm:$0xff]
          %v1296 = vld [vmem:[%s3 + $0xbc] sm:$0xf]
          %v1297 = vld [vmem:[%s4] sm:$0x7]
          %v1330 = vunpack.c.l.b16 %v1265
          %v1331 = vunpack.c.h.b16 %v1265
          %v1332 = vunpack.c.l.b16 %v1266
          %v1333 = vunpack.c.l.b16 %v1267
          %v1334 = vunpack.c.h.b16 %v1267
          %v1335 = vunpack.c.l.b16 %v1268
          %v1336 = vunpack.c.l.b16 %v1269
          %v1337 = vunpack.c.h.b16 %v1269
          %v1338 = vunpack.c.l.b16 %v1270
          %v1339 = vunpack.c.l.b16 %v1271
          %v1340 = vunpack.c.h.b16 %v1271
          %v1341 = vunpack.c.l.b16 %v1272
          %v1342 = vunpack.c.l.b16 %v1273
          %v1343 = vunpack.c.h.b16 %v1273
          %v1344 = vunpack.c.l.b16 %v1274
          %v1345 = vunpack.c.l.b16 %v1275
          %v1346 = vunpack.c.h.b16 %v1275
          %v1347 = vunpack.c.l.b16 %v1276
          %v1348 = vunpack.c.l.b16 %v1277
          %v1349 = vunpack.c.h.b16 %v1277
          %v1350 = vunpack.c.l.b16 %v1278
          %v1351 = vunpack.c.l.b16 %v1279
          %v1352 = vunpack.c.h.b16 %v1279
          %v1353 = vunpack.c.l.b16 %v1280
          %v1354 = vunpack.c.l.b16 %v1281
          %v1355 = vunpack.c.h.b16 %v1281
          %v1356 = vunpack.c.l.b16 %v1282
          %v1357 = vunpack.c.l.b16 %v1283
          %v1358 = vunpack.c.h.b16 %v1283
          %v1359 = vunpack.c.l.b16 %v1284
          %v1360 = vunpack.c.l.b16 %v1285
          %v1361 = vunpack.c.h.b16 %v1285
          %v1362 = vunpack.c.l.b16 %v1286
          %v1363 = vunpack.c.l.b16 %v1287
          %v1364 = vunpack.c.h.b16 %v1287
          %v1365 = vunpack.c.l.b16 %v1288
          %v1366 = vunpack.c.l.b16 %v1289
          %v1367 = vunpack.c.h.b16 %v1289
          %v1368 = vunpack.c.l.b16 %v1290
          %v1369 = vunpack.c.l.b16 %v1291
          %v1370 = vunpack.c.h.b16 %v1291
          %v1371 = vunpack.c.l.b16 %v1292
          %v1372 = vunpack.c.l.b16 %v1293
          %v1373 = vunpack.c.h.b16 %v1293
          %v1374 = vunpack.c.l.b16 %v1294
          %v1375 = vunpack.c.l.b16 %v1295
          %v1376 = vunpack.c.h.b16 %v1295
          %v1377 = vunpack.c.l.b16 %v1296
          %v1378 = vpack.c.b16 %v1333, %v1330
          %v1379 = vpack.c.b16 %v1334, %v1331
          %v1380 = vpack.c.b16 %v1335, %v1332
          %v1381 = vpack.c.b16 %v1339, %v1336
          %v1382 = vpack.c.b16 %v1340, %v1337
          %v1383 = vpack.c.b16 %v1341, %v1338
          %v1384 = vpack.c.b16 %v1345, %v1342
          %v1385 = vpack.c.b16 %v1346, %v1343
          %v1386 = vpack.c.b16 %v1347, %v1344
          %v1387 = vpack.c.b16 %v1351, %v1348
          %v1388 = vpack.c.b16 %v1352, %v1349
          %v1389 = vpack.c.b16 %v1353, %v1350
          %v1390 = vpack.c.b16 %v1357, %v1354
          %v1391 = vpack.c.b16 %v1358, %v1355
          %v1392 = vpack.c.b16 %v1359, %v1356
          %v1393 = vpack.c.b16 %v1363, %v1360
          %v1394 = vpack.c.b16 %v1364, %v1361
          %v1395 = vpack.c.b16 %v1365, %v1362
          %v1396 = vpack.c.b16 %v1369, %v1366
          %v1397 = vpack.c.b16 %v1370, %v1367
          %v1398 = vpack.c.b16 %v1371, %v1368
          %v1399 = vpack.c.b16 %v1375, %v1372
          %v1400 = vpack.c.b16 %v1376, %v1373
          %v1401 = vpack.c.b16 %v1377, %v1374
          %v1427 = vperm.slane %v1297, 0
          %v1428 = vperm.slane %v1297, 1
          %v1429 = vperm.slane %v1297, 2
          %1433 = vmatpush.bf16.msra.mxu0 %v1399
          %1434 = vmatpush.bf16.msra.mxu0 %v1396
          %1435 = vmatpush.bf16.msra.mxu0 %v1393
          %1436 = vmatpush.bf16.msra.mxu0 %v1390
          %1437 = vmatpush.bf16.msra.mxu0 %v1387
          %1438 = vmatpush.bf16.msra.mxu0 %v1384
          %1439 = vmatpush.bf16.msra.mxu0 %v1381
          %1440 = vmatpush.bf16.msra.mxu0 %v1378
          %1441 = vmatmul.bf16.gmra.mxu0 %v1264
          %v1442 = vpop.f32.mrf.mxu0
          %v1443 = vadd.f32 %v1427, %v1442
          %v1444 = vpop.f32.mrf.mxu0
          %1445 = vdwg.mxu0
          %1446 = vmatpush.bf16.msra.mxu0 %v1400
          %1447 = vmatpush.bf16.msra.mxu0 %v1397
          %1448 = vmatpush.bf16.msra.mxu0 %v1394
          %1449 = vmatpush.bf16.msra.mxu0 %v1391
          %1450 = vmatpush.bf16.msra.mxu0 %v1388
          %1451 = vmatpush.bf16.msra.mxu0 %v1385
          %1452 = vmatpush.bf16.msra.mxu0 %v1382
          %1453 = vmatpush.bf16.msra.mxu0 %v1379
          %1454 = vmatmul.bf16.gmra.mxu0 %v1264
          %v1455 = vpop.f32.mrf.mxu0
          %v1456 = vadd.f32 %v1428, %v1455
          %v1457 = vpop.f32.mrf.mxu0
          %1458 = vdwg.mxu0
          %1459 = vmatpush.bf16.msra.mxu0 %v1401
          %1460 = vmatpush.bf16.msra.mxu0 %v1398
          %1461 = vmatpush.bf16.msra.mxu0 %v1395
          %1462 = vmatpush.bf16.msra.mxu0 %v1392
          %1463 = vmatpush.bf16.msra.mxu0 %v1389
          %1464 = vmatpush.bf16.msra.mxu0 %v1386
          %1465 = vmatpush.bf16.msra.mxu0 %v1383
          %1466 = vmatpush.bf16.msra.mxu0 %v1380
          %1467 = vmatmul.bf16.gmra.mxu0 %v1264
          %v1468 = vpop.f32.mrf.mxu0
          %v1469 = vadd.f32 %v1429, %v1468
          %v1470 = vpop.f32.mrf.mxu0
          %1471 = vdwg.mxu0
          %v1475 = vrot.slane %v1456, 7
          %v1476 = vrot.slane %v1469, 6
          %vm1477 = vcmask 1040384
          %v1478 = vsel %vm1477, %v1443, %v1475
          %vm1479 = vcmask 1041408
          %v1480 = vsel %vm1479, %v1478, %v1476
          %v1482 = vlaneseq
          %vm1483 = vcmp.ge.s32.totalorder %v1482, 0
          %vm1484 = vcmp.lt.s32.totalorder %v1482, 384
          %vm1485 = vmand %vm1483, %vm1484
          %1486 = vst.msk [vmem:[%s332] sm:$0x7] %vm1485, %v1480
          %vm1487 = vcmask 122880
          %v1488 = vsel %vm1487, %v1443, -inf
          %1489 = vmax.xlane.f32.xlu0 %v1488
          %v1490 = vpop.xlane.xlu0 %1489
          %v1491 = vsub.f32 %v1443, %v1490
          %v1492 = vmul.f32 %v1491, 1.442695
          %v1493 = vpow.pop %v1492
          %v1494 = vsel %vm1487, %v1493, 0.0
          %1495 = vadd.xlane.f32.xlu0 %v1494
          %v1496 = vpop.xlane.xlu0 %1495
          %v1497 = vrcp.pop %v1496
          %v1498 = vmul.f32 %v1496, %v1497
          %v1499 = vsub.f32 1.0, %v1498
          %v1500 = vmul.f32 %v1497, %v1499
          %v1501 = vadd.f32 %v1497, %v1500
          %vm1502 = vweird.f32 %v1496
          %vm1503 = vweird.f32 %v1497
          %vm1504 = vmor %vm1502, %vm1503
          %v1505 = vsel %vm1504, %v1497, %v1501
          %v1506 = vand.u32 2147483647, %v1496
          %vm1507 = vcmp.eq.f32.partialorder %v1506, 8.507059e+37
          %v1508 = vand.u32 %v1496, 2147483648
          %v1509 = vor.u32 1.1754944e-38, %v1508
          %v1510 = vsel %vm1507, %v1509, %v1505
          %v1511 = vmul.f32 %v1493, %v1510
          %1512 = vst.msk [vmem:[%s338] sm:$0x1] %vm1487, %v1511
        $region48: #{tpu_custom_call.1} parent=39 // pred_fallthru
          _
        %s1513 = sand.u32 %s161, 1
        %s1514 = scalar_lea.sflag [#allocation3], %s1513
        %s1515 = sand.u32 %s161, 1
        %s1516 = smul.addr %s1515, 64
        %s1517 = scalar_lea.vmem [#allocation2], %s1516
        %s1518 = sand.u32 %s29, 1
        %s1519 = scalar_lea.sflag [#allocation5], %s1518
        %s1520 = sand.u32 %s187, 1
        %s1521 = scalar_lea.vmem [#allocation4], %s1520
        %s1522 = sand.u32 %s29, 1
        %s1523 = scalar_lea.sflag [#allocation5], %s1522
        %s1524 = sand.u32 %s213, 1
        %s1525 = smul.addr %s1524, 3
        %s1526 = scalar_lea.vmem [#allocation6], %s1525
        %s1527 = sand.u32 %s239, 1
        %s1528 = scalar_lea.sflag [#allocation8], %s1527
        %s1529 = sand.u32 %s239, 1
        %s1530 = scalar_lea.vmem [#allocation7], %s1529
        // Predicated region
        $region49: #{tpu_custom_call.1} parent=39 // pred_check
          %p1531 = pneg %p171
        $region50: #{tpu_custom_call.1} parent=39 // pred_check_branch
          %1533 = sbr.rel (%p1531) target = $region52
        $region51: #{tpu_custom_call.1} parent=39 // pred_region
          %s1534 = smul.u32 8, %s34
          %1536 = vsyncadd %s1514, 0
          %s1537 = smul.addr %s1534, 2
          %s1538 = smul.addr %s33, 32
          %s1539 = sadd.s32 %s1537, %s1538
          %s1540 = smul.addr %s1539, 4
          %s1541 = scalar_lea.hbm %s5, %s1540
          %s1542 = sshll.u32 %s1517, 4
          %s1543 = int_to_ptr.vmem [resolvable:$true] %s1542
          %s1544 = sshll.u32 %s1541, 4
          %s1545 = int_to_ptr.hbm [resolvable:$true] %s1544
          %1550 = dma.vmem_to_hbm [thread:$0]  %s1543, 1024, %s1545, %s1514, 64, 64, 4
        $region52: #{tpu_custom_call.1} parent=39 // pred_fallthru
          _
        // Predicated region
        $region53: #{tpu_custom_call.1} parent=39 // pred_check
          %p1551 = pneg %p197
        $region54: #{tpu_custom_call.1} parent=39 // pred_check_branch
          %1553 = sbr.rel (%p1551) target = $region56
        $region55: #{tpu_custom_call.1} parent=39 // pred_region
          %1555 = vsyncadd %s1519, 0
          %s1556 = scalar_lea.hbm %s6, %s33
          %s1558 = sshll.u32 %s1521, 4
          %s1559 = int_to_ptr.vmem [resolvable:$true] %s1558
          %s1560 = sshll.u32 %s1556, 4
          %s1561 = int_to_ptr.hbm [resolvable:$true] %s1560
          %1563 = dma.vmem_to_hbm [thread:$0]  %s1559, 16, %s1561, %s1519
        $region56: #{tpu_custom_call.1} parent=39 // pred_fallthru
          _
        // Predicated region
        $region57: #{tpu_custom_call.1} parent=39 // pred_check
          %p1564 = pneg %p223
        $region58: #{tpu_custom_call.1} parent=39 // pred_check_branch
          %1566 = sbr.rel (%p1564) target = $region60
        $region59: #{tpu_custom_call.1} parent=39 // pred_region
          %1568 = vsyncadd %s1523, 0
          %s1569 = smul.addr %s33, 3
          %s1570 = scalar_lea.hbm %s7, %s1569
          %s1572 = sshll.u32 %s1526, 4
          %s1573 = int_to_ptr.vmem [resolvable:$true] %s1572
          %s1574 = sshll.u32 %s1570, 4
          %s1575 = int_to_ptr.hbm [resolvable:$true] %s1574
          %1577 = dma.vmem_to_hbm [thread:$0]  %s1573, 48, %s1575, %s1523
        $region60: #{tpu_custom_call.1} parent=39 // pred_fallthru
          _
        // Predicated region
        $region61: #{tpu_custom_call.1} parent=39 // pred_check
          %p1578 = pneg %p249
        $region62: #{tpu_custom_call.1} parent=39 // pred_check_branch
          %1580 = sbr.rel (%p1578) target = $region64
        $region63: #{tpu_custom_call.1} parent=39 // pred_region
          %1582 = vsyncadd %s1528, 0
          %s1583 = scalar_lea.hbm %s8, %s33
          %s1585 = sshll.u32 %s1530, 4
          %s1586 = int_to_ptr.vmem [resolvable:$true] %s1585
          %s1587 = sshll.u32 %s1583, 4
          %s1588 = int_to_ptr.hbm [resolvable:$true] %s1587
          %1590 = dma.vmem_to_hbm [thread:$0]  %s1586, 16, %s1588, %s1528
        $region64: #{tpu_custom_call.1} parent=39 // pred_fallthru
          _
      $region40: #{tpu_custom_call.1} parent=5 // pred_fallthru
        _
      %p1591 = scmp.le.s32.totalorder 2, %s24
      // Predicated region
      $region65: #{tpu_custom_call.1} parent=5 // pred_check
        %p1592 = pneg %p1591
      $region66: #{tpu_custom_call.1} parent=5 // pred_check_branch
        %1594 = sbr.rel (%p1592) target = $region68
      $region67: #{tpu_custom_call.1} parent=5 // pred_region
        %s1595 = ssub.s32 %s24, 2
        // Predicated region
        $region69: #{tpu_custom_call.1} parent=67 // pred_check
          %p1596 = pneg %p177
        $region70: #{tpu_custom_call.1} parent=67 // pred_check_branch
          %1598 = sbr.rel (%p1596) target = $region72
        $region71: #{tpu_custom_call.1} parent=67 // pred_region
          %s1599 = sand.u32 %s162, 1
          %s1600 = scalar_lea.sflag [#allocation3], %s1599
          %s1601 = sand.u32 %s162, 1
          %s1602 = smul.addr %s1601, 64
          %s1603 = scalar_lea.vmem [#allocation2], %s1602
          %1605 = dma.done %s1600, 1024
        $region72: #{tpu_custom_call.1} parent=67 // pred_fallthru
          _
        // Predicated region
        $region73: #{tpu_custom_call.1} parent=67 // pred_check
          %p1606 = pneg %p203
        $region74: #{tpu_custom_call.1} parent=67 // pred_check_branch
          %1608 = sbr.rel (%p1606) target = $region76
        $region75: #{tpu_custom_call.1} parent=67 // pred_region
          %s1609 = sand.u32 %s30, 1
          %s1610 = scalar_lea.sflag [#allocation5], %s1609
          %s1611 = sand.u32 %s188, 1
          %s1612 = scalar_lea.vmem [#allocation4], %s1611
          %1614 = dma.done %s1610, 16
        $region76: #{tpu_custom_call.1} parent=67 // pred_fallthru
          _
        // Predicated region
        $region77: #{tpu_custom_call.1} parent=67 // pred_check
          %p1615 = pneg %p229
        $region78: #{tpu_custom_call.1} parent=67 // pred_check_branch
          %1617 = sbr.rel (%p1615) target = $region80
        $region79: #{tpu_custom_call.1} parent=67 // pred_region
          %s1618 = sand.u32 %s30, 1
          %s1619 = scalar_lea.sflag [#allocation5], %s1618
          %s1620 = sand.u32 %s214, 1
          %s1621 = smul.addr %s1620, 3
          %s1622 = scalar_lea.vmem [#allocation6], %s1621
          %1624 = dma.done %s1619, 48
        $region80: #{tpu_custom_call.1} parent=67 // pred_fallthru
          _
        // Predicated region
        $region81: #{tpu_custom_call.1} parent=67 // pred_check
          %p1625 = pneg %p255
        $region82: #{tpu_custom_call.1} parent=67 // pred_check_branch
          %1627 = sbr.rel (%p1625) target = $region84
        $region83: #{tpu_custom_call.1} parent=67 // pred_region
          %s1628 = sand.u32 %s240, 1
          %s1629 = scalar_lea.sflag [#allocation8], %s1628
          %s1630 = sand.u32 %s240, 1
          %s1631 = scalar_lea.vmem [#allocation7], %s1630
          %1633 = dma.done %s1629, 16
        $region84: #{tpu_custom_call.1} parent=67 // pred_fallthru
          _
      $region68: #{tpu_custom_call.1} parent=5 // pred_fallthru
        _
    $region6: #{tpu_custom_call.1} parent=1 // loop_footer
      %s28 = sadd.s32 1, %s24
    $region7: #{tpu_custom_call.1} parent=1 // loop_footer_branch
      %23 = sbr.rel target = $region3
    $region8: #{tpu_custom_call.1} parent=1 // loop_exit
      _
    %1634 = vsyncpa [#allocation3], 1
    %s1635 = scalar_lea.sflag [#allocation3], 1
    %1636 = vsyncpa %s1635, 1
    %1637 = vsyncpa [#allocation5], 1
    %s1638 = scalar_lea.sflag [#allocation5], 1
    %1639 = vsyncpa %s1638, 1
    %1640 = vsyncpa [#allocation8], 1
    %s1641 = scalar_lea.sflag [#allocation8], 1
    %1642 = vsyncpa %s1641, 1

</llo_original>
